<compile_context>
chip_gen: v7x
topology: tpu7x:2x2x1
jax: 0.10.0
libtpu: 0.0.40
codegen_flags: <defaults>
</compile_context>

<pallas_src>
import functools

import jax
import jax.numpy as jnp
from jax import lax
from jax.experimental import pallas as pl
from jax.experimental.pallas import tpu as pltpu


def _vmem_limit_bytes():
    """Leave headroom under physical VMEM (64 MiB/TC on v7x, 128 MiB on v5e/v6e)."""
    try:
        cap = int(pltpu.get_tpu_info().vmem_capacity_bytes)
    except Exception:
        cap = 64 * 1024 * 1024
    return int(min(max(cap - 24 * 1024 * 1024, 32 * 1024 * 1024), 96 * 1024 * 1024))


def _pw_gnn_kernel(xf_ref, xt_ref, nn_ref, et_ref, wsum_ref, w2_ref, o_ref, *,
                   Np, tn, K, Kc, E, nou):
    """One (batch element, node tile) per grid step.

    xf_ref   : (1, nin, Np)     bf16  node features, FULL node axis (gather sources)
    xt_ref   : (1, nin, tn)     bf16  node features, this tile's destination columns
    nn_ref   : (1, 1, 1, K*tn)  int32 neighbor ids, k-major flattened onto the lane axis
    et_ref   : (1, K, E, tn)    f32   edge-type weights for this tile
    wsum_ref : (E*nou, nin)     bf16  (filters1 + filters2), row index = e*nou + o
    w2_ref   : (E*nou, nin)     bf16  filters2, same row layout
    o_ref    : (1, nou, tn)     f32   pre-BN output tile (lane-dense)
    """
    xb = xf_ref[0]                                                        # (nin, Np)

    # k-independent per-node term: nfeature + efeature = (W1 + W2) @ x  (one fused matmul)
    npef = jnp.dot(wsum_ref[...], xt_ref[0],
                   preferred_element_type=jnp.float32)                    # (E*nou, tn)

    nn_row = nn_ref[0, 0]                                                 # (1, K*tn) int32

    agg = None
    for kc0 in range(0, K, Kc):
        kc = min(Kc, K - kc0)
        # One-hot gather matrix for a chunk of neighbor slots, batched on the lane axis:
        #   g[m, ki*tn + n] = (nn_idx[kc0+ki, n] == m).   0/1 is exact in bf16.
        nn_c = nn_row[:, kc0 * tn:(kc0 + kc) * tn]                        # (1, kc*tn)
        src = lax.broadcasted_iota(jnp.int32, (Np, kc * tn), 0)
        g = (src == nn_c).astype(jnp.bfloat16)                            # (Np, kc*tn)

        # Gather-first: gather the narrow input x, then apply W2 (f32 accumulation; the one-hot
        # selection is exact, so the bf16 round-trip below is lossless).
        x_nn = jnp.dot(xb, g, preferred_element_type=jnp.float32)         # (nin, kc*tn)
        ef_nn = jnp.dot(w2_ref[...], x_nn.astype(jnp.bfloat16),
                        preferred_element_type=jnp.float32)               # (E*nou, kc*tn)

        for ki in range(kc):
            k = kc0 + ki
            # ORIG_WITH_DIFF: nfeature + efeature - efeature_nn, contracted with etype over e.
            diff = npef - ef_nn[:, ki * tn:(ki + 1) * tn]                 # (E*nou, tn)
            et_k = et_ref[0, k]                                           # (E, tn)
            contrib = None
            for e in range(E):
                term = diff[e * nou:(e + 1) * nou, :] * et_k[e:e + 1, :]  # bcast over channels
                contrib = term if contrib is None else contrib + term
            # 'max' aggregator over neighbor slots, accumulated elementwise.
            agg = contrib if agg is None else jnp.maximum(agg, contrib)

    o_ref[0] = agg


def pw_gnn_op_forward(x, nn_idx, etype, w1, w2, bias, gamma, beta, eps=1e-5):
    """x:(B,nin,N,1)  nn_idx:(B,N,K) int  etype:(B,E,N,K)  w1,w2:(nin,nou,E)  -> (B,nou,N,1)."""
    # NOTE: `bias` is added before training-mode BatchNorm in the reference, so the batch-mean
    # subtraction cancels it exactly — it is intentionally not used here.
    # TODO(synk): if an eval-mode (running-stats) BN path is added, fold bias into beta instead.
    B, nin, N, one = x.shape
    assert one == 1
    K = nn_idx.shape[2]
    E = etype.shape[1]
    nou = w1.shape[1]

    # ---- lane-dense layout: nodes on the lane axis, padded to a multiple of 128 ----
    Np = max(128, ((N + 127) // 128) * 128)
    pad = Np - N
    tn = next(c for c in (512, 256, 128) if Np % c == 0)            # node tile (lane width)
    Jt = Np // tn
    # bound the per-chunk one-hot / iota VMEM footprint (Np * Kc * tn elements <= 1M)
    Kc = max(1, min(K, (1 << 20) // (Np * tn)))

    x_t = x[..., 0].astype(jnp.bfloat16)                             # (B, nin, N)
    nn_t = jnp.transpose(nn_idx, (0, 2, 1)).astype(jnp.int32)        # (B, K, N)
    et_t = jnp.transpose(etype, (0, 3, 1, 2)).astype(jnp.float32)    # (B, K, E, N)
    if pad:
        x_t = jnp.pad(x_t, ((0, 0), (0, 0), (0, pad)))               # zero features
        nn_t = jnp.pad(nn_t, ((0, 0), (0, 0), (0, pad)))             # padded nodes -> id 0
        et_t = jnp.pad(et_t, ((0, 0), (0, 0), (0, 0), (0, pad)))     # zero edge weights
    # neighbor ids per node tile, flattened k-major onto the lane axis: (B, Jt, 1, K*tn)
    nn_t = nn_t.reshape(B, K, Jt, tn).transpose(0, 2, 1, 3).reshape(B, Jt, 1, K * tn)

    # filters flattened to (E*nou, nin), row = e*nou + o; (W1+W2) fuses the nf+ef matmul
    wsum_t = jnp.transpose(w1 + w2, (2, 1, 0)).reshape(E * nou, nin).astype(jnp.bfloat16)
    w2_t = jnp.transpose(w2, (2, 1, 0)).reshape(E * nou, nin).astype(jnp.bfloat16)

    kernel = functools.partial(_pw_gnn_kernel, Np=Np, tn=tn, K=K, Kc=Kc, E=E, nou=nou)

    feats = pl.pallas_call(
        kernel,
        out_shape=jax.ShapeDtypeStruct((B, nou, Np), jnp.float32),
        grid=(B, Jt),
        in_specs=[
            pl.BlockSpec((1, nin, Np), lambda b, j: (b, 0, 0)),          # x, full node axis
            pl.BlockSpec((1, nin, tn), lambda b, j: (b, 0, j)),          # x, tile columns
            pl.BlockSpec((1, 1, 1, K * tn), lambda b, j: (b, j, 0, 0)),  # neighbor ids
            pl.BlockSpec((1, K, E, tn), lambda b, j: (b, 0, 0, j)),      # edge-type weights
            pl.BlockSpec((E * nou, nin), lambda b, j: (0, 0)),           # W1 + W2
            pl.BlockSpec((E * nou, nin), lambda b, j: (0, 0)),           # W2
        ],
        out_specs=pl.BlockSpec((1, nou, tn), lambda b, j: (b, 0, j)),
        compiler_params=pltpu.CompilerParams(
            dimension_semantics=("parallel", "parallel"),  # megacore on v7x; no-op v5e/v6e
            vmem_limit_bytes=_vmem_limit_bytes(),
        ),
    )(x_t, x_t, nn_t, et_t, wsum_t, w2_t)                                # (B, nou, Np)

    # Training-mode BatchNorm2d (biased batch stats over (B, N, 1) per channel) + ReLU — a tiny
    # memory-bound epilogue that XLA fuses; keeping it out of the kernel keeps the grid parallel.
    # TODO(synk): running_mean/running_var updates (training side effect) are not emitted.
    feats = feats[:, :, :N]                                              # drop node padding
    mean = jnp.mean(feats, axis=(0, 2), keepdims=True)
    var = jnp.mean(jnp.square(feats - mean), axis=(0, 2), keepdims=True)
    g = gamma.reshape(1, nou, 1).astype(jnp.float32)
    be = beta.reshape(1, nou, 1).astype(jnp.float32)
    out = jnp.maximum((feats - mean) * lax.rsqrt(var + eps) * g + be, 0.0)
    return out[..., None]                                                # (B, nou, N, 1)


if __name__ == "__main__":
    B, nin, nou, N, K, E = 2, 4, 32, 16, 8, 3

    key = jax.random.PRNGKey(0)
    k1, k2, k3, k4, k5, k6 = jax.random.split(key, 6)

    # inputs (PyTorch layouts)
    x = jax.random.normal(k1, (B, nin, N, 1), jnp.float32)          # NCHW, W=1
    nn_idx = jax.random.randint(k2, (B, N, K), 0, N, jnp.int32)     # neighbor indices
    etype = jax.random.uniform(k3, (B, E, N, K), jnp.float32)       # edge-type weights

    # deterministic parameter init matching the module's __init__
    w1 = jax.random.uniform(k4, (nin, nou, E), jnp.float32, -0.01, 0.01)   # filters1
    w2 = jax.random.uniform(k5, (nin, nou, E), jnp.float32, -0.01, 0.01)   # filters2
    bias = jax.random.uniform(k6, (nou,), jnp.float32, 0.0, 0.05)          # bias
    gamma = jnp.ones((nou,), jnp.float32)                                   # BN weight
    beta = jnp.zeros((nou,), jnp.float32)                                   # BN bias

    out = pw_gnn_op_forward(x, nn_idx, etype, w1, w2, bias, gamma, beta)
    out = jax.block_until_ready(out)
    assert out.shape == (B, nou, N, 1) and out.dtype == jnp.float32
    assert bool(jnp.all(jnp.isfinite(out)))
    print("KERNEL_OK")
</pallas_src>

<mosaic_0001>
module attributes {stable_mosaic.version = 11 : i64} {
  func.func @_pw_gnn_kernel(%arg0: i32, %arg1: i32, %arg2: memref<1x4x128xbf16, #tpu.memory_space<vmem>>, %arg3: memref<1x4x128xbf16, #tpu.memory_space<vmem>>, %arg4: memref<1x1x1x1024xi32, #tpu.memory_space<vmem>>, %arg5: memref<1x8x3x128xf32, #tpu.memory_space<vmem>>, %arg6: memref<96x4xbf16, #tpu.memory_space<vmem>>, %arg7: memref<96x4xbf16, #tpu.memory_space<vmem>>, %arg8: memref<1x32x128xf32, #tpu.memory_space<vmem>>) attributes {dimension_semantics = [#tpu.dimension_semantics<parallel>, #tpu.dimension_semantics<parallel>], iteration_bounds = array<i64: 2, 1>, scalar_prefetch = 0 : i64, scratch_operands = 0 : i64, tpu.core_type = #tpu.core_type<tc>, window_params = [{transform_indices = @transform_0, window_bounds = array<i64: 1, 4, 128>}, {transform_indices = @transform_1, window_bounds = array<i64: 1, 4, 128>}, {transform_indices = @transform_2, window_bounds = array<i64: 1, 1, 1, 1024>}, {transform_indices = @transform_3, window_bounds = array<i64: 1, 8, 3, 128>}, {pipeline_mode = #tpu.pipeline_mode<synchronous>, transform_indices = @transform_4, window_bounds = array<i64: 96, 4>}, {pipeline_mode = #tpu.pipeline_mode<synchronous>, transform_indices = @transform_5, window_bounds = array<i64: 96, 4>}, {transform_indices = @transform_6, window_bounds = array<i64: 1, 32, 128>}]} {
    %c0 = arith.constant 0 : index
    %c0_0 = arith.constant 0 : index
    %c0_1 = arith.constant 0 : index
    %0 = vector.load %arg2[%c0, %c0_0, %c0_1] : memref<1x4x128xbf16, #tpu.memory_space<vmem>>, vector<1x4x128xbf16>
    %1 = vector.shape_cast %0 : vector<1x4x128xbf16> to vector<4x128xbf16>
    %c0_2 = arith.constant 0 : index
    %c0_3 = arith.constant 0 : index
    %2 = vector.load %arg6[%c0_2, %c0_3] : memref<96x4xbf16, #tpu.memory_space<vmem>>, vector<96x4xbf16>
    %c0_4 = arith.constant 0 : index
    %c0_5 = arith.constant 0 : index
    %c0_6 = arith.constant 0 : index
    %3 = vector.load %arg3[%c0_4, %c0_5, %c0_6] : memref<1x4x128xbf16, #tpu.memory_space<vmem>>, vector<1x4x128xbf16>
    %4 = vector.shape_cast %3 : vector<1x4x128xbf16> to vector<4x128xbf16>
    %cst = arith.constant dense<0.000000e+00> : vector<96x128xf32>
    %5 = tpu.matmul %2, %4, %cst {dimension_numbers = #tpu.dot_dimension_numbers<[1], [0], [0], [1], [0, 0, 1, 1], [], []>} : vector<96x4xbf16>, vector<4x128xbf16>, vector<96x128xf32> -> vector<96x128xf32>
    %c0_7 = arith.constant 0 : index
    %c0_8 = arith.constant 0 : index
    %c0_9 = arith.constant 0 : index
    %c0_10 = arith.constant 0 : index
    %6 = vector.load %arg4[%c0_7, %c0_8, %c0_9, %c0_10] : memref<1x1x1x1024xi32, #tpu.memory_space<vmem>>, vector<1x1x1x1024xi32>
    %7 = vector.shape_cast %6 : vector<1x1x1x1024xi32> to vector<1x1024xi32>
    %8 = tpu.iota {dimensions = array<i32: 0>} : vector<128x1024xi32>
    %9 = vector.broadcast %7 : vector<1x1024xi32> to vector<128x1024xi32>
    %10 = arith.cmpi eq, %8, %9 : vector<128x1024xi32>
    %11 = arith.extui %10 : vector<128x1024xi1> to vector<128x1024xi32>
    %12 = arith.sitofp %11 : vector<128x1024xi32> to vector<128x1024xf32>
    %13 = arith.truncf %12 : vector<128x1024xf32> to vector<128x1024xbf16>
    %cst_11 = arith.constant dense<0.000000e+00> : vector<4x1024xf32>
    %14 = tpu.matmul %1, %13, %cst_11 {dimension_numbers = #tpu.dot_dimension_numbers<[1], [0], [0], [1], [0, 0, 1, 1], [], []>} : vector<4x128xbf16>, vector<128x1024xbf16>, vector<4x1024xf32> -> vector<4x1024xf32>
    %c0_12 = arith.constant 0 : index
    %c0_13 = arith.constant 0 : index
    %15 = vector.load %arg7[%c0_12, %c0_13] : memref<96x4xbf16, #tpu.memory_space<vmem>>, vector<96x4xbf16>
    %16 = arith.truncf %14 : vector<4x1024xf32> to vector<4x1024xbf16>
    %cst_14 = arith.constant dense<0.000000e+00> : vector<96x1024xf32>
    %17 = tpu.matmul %15, %16, %cst_14 {dimension_numbers = #tpu.dot_dimension_numbers<[1], [0], [0], [1], [0, 0, 1, 1], [], []>} : vector<96x4xbf16>, vector<4x1024xbf16>, vector<96x1024xf32> -> vector<96x1024xf32>
    %18 = vector.extract_strided_slice %17 {offsets = [0, 0], sizes = [96, 128], strides = [1, 1]} : vector<96x1024xf32> to vector<96x128xf32>
    %19 = arith.subf %5, %18 : vector<96x128xf32>
    %c0_15 = arith.constant 0 : index
    %c0_16 = arith.constant 0 : index
    %c0_17 = arith.constant 0 : index
    %c0_18 = arith.constant 0 : index
    %20 = vector.load %arg5[%c0_15, %c0_16, %c0_17, %c0_18] : memref<1x8x3x128xf32, #tpu.memory_space<vmem>>, vector<1x1x3x128xf32>
    %21 = vector.shape_cast %20 : vector<1x1x3x128xf32> to vector<3x128xf32>
    %22 = vector.extract_strided_slice %19 {offsets = [0, 0], sizes = [32, 128], strides = [1, 1]} : vector<96x128xf32> to vector<32x128xf32>
    %23 = vector.extract_strided_slice %21 {offsets = [0, 0], sizes = [1, 128], strides = [1, 1]} : vector<3x128xf32> to vector<1x128xf32>
    %24 = vector.broadcast %23 : vector<1x128xf32> to vector<32x128xf32>
    %25 = arith.mulf %22, %24 : vector<32x128xf32>
    %26 = vector.extract_strided_slice %19 {offsets = [32, 0], sizes = [32, 128], strides = [1, 1]} : vector<96x128xf32> to vector<32x128xf32>
    %27 = vector.extract_strided_slice %21 {offsets = [1, 0], sizes = [1, 128], strides = [1, 1]} : vector<3x128xf32> to vector<1x128xf32>
    %28 = vector.broadcast %27 : vector<1x128xf32> to vector<32x128xf32>
    %29 = arith.mulf %26, %28 : vector<32x128xf32>
    %30 = arith.addf %25, %29 : vector<32x128xf32>
    %31 = vector.extract_strided_slice %19 {offsets = [64, 0], sizes = [32, 128], strides = [1, 1]} : vector<96x128xf32> to vector<32x128xf32>
    %32 = vector.extract_strided_slice %21 {offsets = [2, 0], sizes = [1, 128], strides = [1, 1]} : vector<3x128xf32> to vector<1x128xf32>
    %33 = vector.broadcast %32 : vector<1x128xf32> to vector<32x128xf32>
    %34 = arith.mulf %31, %33 : vector<32x128xf32>
    %35 = arith.addf %30, %34 : vector<32x128xf32>
    %36 = vector.extract_strided_slice %17 {offsets = [0, 128], sizes = [96, 128], strides = [1, 1]} : vector<96x1024xf32> to vector<96x128xf32>
    %37 = arith.subf %5, %36 : vector<96x128xf32>
    %c0_19 = arith.constant 0 : index
    %c1 = arith.constant 1 : index
    %c0_20 = arith.constant 0 : index
    %c0_21 = arith.constant 0 : index
    %38 = vector.load %arg5[%c0_19, %c1, %c0_20, %c0_21] : memref<1x8x3x128xf32, #tpu.memory_space<vmem>>, vector<1x1x3x128xf32>
    %39 = vector.shape_cast %38 : vector<1x1x3x128xf32> to vector<3x128xf32>
    %40 = vector.extract_strided_slice %37 {offsets = [0, 0], sizes = [32, 128], strides = [1, 1]} : vector<96x128xf32> to vector<32x128xf32>
    %41 = vector.extract_strided_slice %39 {offsets = [0, 0], sizes = [1, 128], strides = [1, 1]} : vector<3x128xf32> to vector<1x128xf32>
    %42 = vector.broadcast %41 : vector<1x128xf32> to vector<32x128xf32>
    %43 = arith.mulf %40, %42 : vector<32x128xf32>
    %44 = vector.extract_strided_slice %37 {offsets = [32, 0], sizes = [32, 128], strides = [1, 1]} : vector<96x128xf32> to vector<32x128xf32>
    %45 = vector.extract_strided_slice %39 {offsets = [1, 0], sizes = [1, 128], strides = [1, 1]} : vector<3x128xf32> to vector<1x128xf32>
    %46 = vector.broadcast %45 : vector<1x128xf32> to vector<32x128xf32>
    %47 = arith.mulf %44, %46 : vector<32x128xf32>
    %48 = arith.addf %43, %47 : vector<32x128xf32>
    %49 = vector.extract_strided_slice %37 {offsets = [64, 0], sizes = [32, 128], strides = [1, 1]} : vector<96x128xf32> to vector<32x128xf32>
    %50 = vector.extract_strided_slice %39 {offsets = [2, 0], sizes = [1, 128], strides = [1, 1]} : vector<3x128xf32> to vector<1x128xf32>
    %51 = vector.broadcast %50 : vector<1x128xf32> to vector<32x128xf32>
    %52 = arith.mulf %49, %51 : vector<32x128xf32>
    %53 = arith.addf %48, %52 : vector<32x128xf32>
    %54 = arith.maximumf %35, %53 : vector<32x128xf32>
    %55 = vector.extract_strided_slice %17 {offsets = [0, 256], sizes = [96, 128], strides = [1, 1]} : vector<96x1024xf32> to vector<96x128xf32>
    %56 = arith.subf %5, %55 : vector<96x128xf32>
    %c0_22 = arith.constant 0 : index
    %c2 = arith.constant 2 : index
    %c0_23 = arith.constant 0 : index
    %c0_24 = arith.constant 0 : index
    %57 = vector.load %arg5[%c0_22, %c2, %c0_23, %c0_24] : memref<1x8x3x128xf32, #tpu.memory_space<vmem>>, vector<1x1x3x128xf32>
    %58 = vector.shape_cast %57 : vector<1x1x3x128xf32> to vector<3x128xf32>
    %59 = vector.extract_strided_slice %56 {offsets = [0, 0], sizes = [32, 128], strides = [1, 1]} : vector<96x128xf32> to vector<32x128xf32>
    %60 = vector.extract_strided_slice %58 {offsets = [0, 0], sizes = [1, 128], strides = [1, 1]} : vector<3x128xf32> to vector<1x128xf32>
    %61 = vector.broadcast %60 : vector<1x128xf32> to vector<32x128xf32>
    %62 = arith.mulf %59, %61 : vector<32x128xf32>
    %63 = vector.extract_strided_slice %56 {offsets = [32, 0], sizes = [32, 128], strides = [1, 1]} : vector<96x128xf32> to vector<32x128xf32>
    %64 = vector.extract_strided_slice %58 {offsets = [1, 0], sizes = [1, 128], strides = [1, 1]} : vector<3x128xf32> to vector<1x128xf32>
    %65 = vector.broadcast %64 : vector<1x128xf32> to vector<32x128xf32>
    %66 = arith.mulf %63, %65 : vector<32x128xf32>
    %67 = arith.addf %62, %66 : vector<32x128xf32>
    %68 = vector.extract_strided_slice %56 {offsets = [64, 0], sizes = [32, 128], strides = [1, 1]} : vector<96x128xf32> to vector<32x128xf32>
    %69 = vector.extract_strided_slice %58 {offsets = [2, 0], sizes = [1, 128], strides = [1, 1]} : vector<3x128xf32> to vector<1x128xf32>
    %70 = vector.broadcast %69 : vector<1x128xf32> to vector<32x128xf32>
    %71 = arith.mulf %68, %70 : vector<32x128xf32>
    %72 = arith.addf %67, %71 : vector<32x128xf32>
    %73 = arith.maximumf %54, %72 : vector<32x128xf32>
    %74 = vector.extract_strided_slice %17 {offsets = [0, 384], sizes = [96, 128], strides = [1, 1]} : vector<96x1024xf32> to vector<96x128xf32>
    %75 = arith.subf %5, %74 : vector<96x128xf32>
    %c0_25 = arith.constant 0 : index
    %c3 = arith.constant 3 : index
    %c0_26 = arith.constant 0 : index
    %c0_27 = arith.constant 0 : index
    %76 = vector.load %arg5[%c0_25, %c3, %c0_26, %c0_27] : memref<1x8x3x128xf32, #tpu.memory_space<vmem>>, vector<1x1x3x128xf32>
    %77 = vector.shape_cast %76 : vector<1x1x3x128xf32> to vector<3x128xf32>
    %78 = vector.extract_strided_slice %75 {offsets = [0, 0], sizes = [32, 128], strides = [1, 1]} : vector<96x128xf32> to vector<32x128xf32>
    %79 = vector.extract_strided_slice %77 {offsets = [0, 0], sizes = [1, 128], strides = [1, 1]} : vector<3x128xf32> to vector<1x128xf32>
    %80 = vector.broadcast %79 : vector<1x128xf32> to vector<32x128xf32>
    %81 = arith.mulf %78, %80 : vector<32x128xf32>
    %82 = vector.extract_strided_slice %75 {offsets = [32, 0], sizes = [32, 128], strides = [1, 1]} : vector<96x128xf32> to vector<32x128xf32>
    %83 = vector.extract_strided_slice %77 {offsets = [1, 0], sizes = [1, 128], strides = [1, 1]} : vector<3x128xf32> to vector<1x128xf32>
    %84 = vector.broadcast %83 : vector<1x128xf32> to vector<32x128xf32>
    %85 = arith.mulf %82, %84 : vector<32x128xf32>
    %86 = arith.addf %81, %85 : vector<32x128xf32>
    %87 = vector.extract_strided_slice %75 {offsets = [64, 0], sizes = [32, 128], strides = [1, 1]} : vector<96x128xf32> to vector<32x128xf32>
    %88 = vector.extract_strided_slice %77 {offsets = [2, 0], sizes = [1, 128], strides = [1, 1]} : vector<3x128xf32> to vector<1x128xf32>
    %89 = vector.broadcast %88 : vector<1x128xf32> to vector<32x128xf32>
    %90 = arith.mulf %87, %89 : vector<32x128xf32>
    %91 = arith.addf %86, %90 : vector<32x128xf32>
    %92 = arith.maximumf %73, %91 : vector<32x128xf32>
    %93 = vector.extract_strided_slice %17 {offsets = [0, 512], sizes = [96, 128], strides = [1, 1]} : vector<96x1024xf32> to vector<96x128xf32>
    %94 = arith.subf %5, %93 : vector<96x128xf32>
    %c0_28 = arith.constant 0 : index
    %c4 = arith.constant 4 : index
    %c0_29 = arith.constant 0 : index
    %c0_30 = arith.constant 0 : index
    %95 = vector.load %arg5[%c0_28, %c4, %c0_29, %c0_30] : memref<1x8x3x128xf32, #tpu.memory_space<vmem>>, vector<1x1x3x128xf32>
    %96 = vector.shape_cast %95 : vector<1x1x3x128xf32> to vector<3x128xf32>
    %97 = vector.extract_strided_slice %94 {offsets = [0, 0], sizes = [32, 128], strides = [1, 1]} : vector<96x128xf32> to vector<32x128xf32>
    %98 = vector.extract_strided_slice %96 {offsets = [0, 0], sizes = [1, 128], strides = [1, 1]} : vector<3x128xf32> to vector<1x128xf32>
    %99 = vector.broadcast %98 : vector<1x128xf32> to vector<32x128xf32>
    %100 = arith.mulf %97, %99 : vector<32x128xf32>
    %101 = vector.extract_strided_slice %94 {offsets = [32, 0], sizes = [32, 128], strides = [1, 1]} : vector<96x128xf32> to vector<32x128xf32>
    %102 = vector.extract_strided_slice %96 {offsets = [1, 0], sizes = [1, 128], strides = [1, 1]} : vector<3x128xf32> to vector<1x128xf32>
    %103 = vector.broadcast %102 : vector<1x128xf32> to vector<32x128xf32>
    %104 = arith.mulf %101, %103 : vector<32x128xf32>
    %105 = arith.addf %100, %104 : vector<32x128xf32>
    %106 = vector.extract_strided_slice %94 {offsets = [64, 0], sizes = [32, 128], strides = [1, 1]} : vector<96x128xf32> to vector<32x128xf32>
    %107 = vector.extract_strided_slice %96 {offsets = [2, 0], sizes = [1, 128], strides = [1, 1]} : vector<3x128xf32> to vector<1x128xf32>
    %108 = vector.broadcast %107 : vector<1x128xf32> to vector<32x128xf32>
    %109 = arith.mulf %106, %108 : vector<32x128xf32>
    %110 = arith.addf %105, %109 : vector<32x128xf32>
    %111 = arith.maximumf %92, %110 : vector<32x128xf32>
    %112 = vector.extract_strided_slice %17 {offsets = [0, 640], sizes = [96, 128], strides = [1, 1]} : vector<96x1024xf32> to vector<96x128xf32>
    %113 = arith.subf %5, %112 : vector<96x128xf32>
    %c0_31 = arith.constant 0 : index
    %c5 = arith.constant 5 : index
    %c0_32 = arith.constant 0 : index
    %c0_33 = arith.constant 0 : index
    %114 = vector.load %arg5[%c0_31, %c5, %c0_32, %c0_33] : memref<1x8x3x128xf32, #tpu.memory_space<vmem>>, vector<1x1x3x128xf32>
    %115 = vector.shape_cast %114 : vector<1x1x3x128xf32> to vector<3x128xf32>
    %116 = vector.extract_strided_slice %113 {offsets = [0, 0], sizes = [32, 128], strides = [1, 1]} : vector<96x128xf32> to vector<32x128xf32>
    %117 = vector.extract_strided_slice %115 {offsets = [0, 0], sizes = [1, 128], strides = [1, 1]} : vector<3x128xf32> to vector<1x128xf32>
    %118 = vector.broadcast %117 : vector<1x128xf32> to vector<32x128xf32>
    %119 = arith.mulf %116, %118 : vector<32x128xf32>
    %120 = vector.extract_strided_slice %113 {offsets = [32, 0], sizes = [32, 128], strides = [1, 1]} : vector<96x128xf32> to vector<32x128xf32>
    %121 = vector.extract_strided_slice %115 {offsets = [1, 0], sizes = [1, 128], strides = [1, 1]} : vector<3x128xf32> to vector<1x128xf32>
    %122 = vector.broadcast %121 : vector<1x128xf32> to vector<32x128xf32>
    %123 = arith.mulf %120, %122 : vector<32x128xf32>
    %124 = arith.addf %119, %123 : vector<32x128xf32>
    %125 = vector.extract_strided_slice %113 {offsets = [64, 0], sizes = [32, 128], strides = [1, 1]} : vector<96x128xf32> to vector<32x128xf32>
    %126 = vector.extract_strided_slice %115 {offsets = [2, 0], sizes = [1, 128], strides = [1, 1]} : vector<3x128xf32> to vector<1x128xf32>
    %127 = vector.broadcast %126 : vector<1x128xf32> to vector<32x128xf32>
    %128 = arith.mulf %125, %127 : vector<32x128xf32>
    %129 = arith.addf %124, %128 : vector<32x128xf32>
    %130 = arith.maximumf %111, %129 : vector<32x128xf32>
    %131 = vector.extract_strided_slice %17 {offsets = [0, 768], sizes = [96, 128], strides = [1, 1]} : vector<96x1024xf32> to vector<96x128xf32>
    %132 = arith.subf %5, %131 : vector<96x128xf32>
    %c0_34 = arith.constant 0 : index
    %c6 = arith.constant 6 : index
    %c0_35 = arith.constant 0 : index
    %c0_36 = arith.constant 0 : index
    %133 = vector.load %arg5[%c0_34, %c6, %c0_35, %c0_36] : memref<1x8x3x128xf32, #tpu.memory_space<vmem>>, vector<1x1x3x128xf32>
    %134 = vector.shape_cast %133 : vector<1x1x3x128xf32> to vector<3x128xf32>
    %135 = vector.extract_strided_slice %132 {offsets = [0, 0], sizes = [32, 128], strides = [1, 1]} : vector<96x128xf32> to vector<32x128xf32>
    %136 = vector.extract_strided_slice %134 {offsets = [0, 0], sizes = [1, 128], strides = [1, 1]} : vector<3x128xf32> to vector<1x128xf32>
    %137 = vector.broadcast %136 : vector<1x128xf32> to vector<32x128xf32>
    %138 = arith.mulf %135, %137 : vector<32x128xf32>
    %139 = vector.extract_strided_slice %132 {offsets = [32, 0], sizes = [32, 128], strides = [1, 1]} : vector<96x128xf32> to vector<32x128xf32>
    %140 = vector.extract_strided_slice %134 {offsets = [1, 0], sizes = [1, 128], strides = [1, 1]} : vector<3x128xf32> to vector<1x128xf32>
    %141 = vector.broadcast %140 : vector<1x128xf32> to vector<32x128xf32>
    %142 = arith.mulf %139, %141 : vector<32x128xf32>
    %143 = arith.addf %138, %142 : vector<32x128xf32>
    %144 = vector.extract_strided_slice %132 {offsets = [64, 0], sizes = [32, 128], strides = [1, 1]} : vector<96x128xf32> to vector<32x128xf32>
    %145 = vector.extract_strided_slice %134 {offsets = [2, 0], sizes = [1, 128], strides = [1, 1]} : vector<3x128xf32> to vector<1x128xf32>
    %146 = vector.broadcast %145 : vector<1x128xf32> to vector<32x128xf32>
    %147 = arith.mulf %144, %146 : vector<32x128xf32>
    %148 = arith.addf %143, %147 : vector<32x128xf32>
    %149 = arith.maximumf %130, %148 : vector<32x128xf32>
    %150 = vector.extract_strided_slice %17 {offsets = [0, 896], sizes = [96, 128], strides = [1, 1]} : vector<96x1024xf32> to vector<96x128xf32>
    %151 = arith.subf %5, %150 : vector<96x128xf32>
    %c0_37 = arith.constant 0 : index
    %c7 = arith.constant 7 : index
    %c0_38 = arith.constant 0 : index
    %c0_39 = arith.constant 0 : index
    %152 = vector.load %arg5[%c0_37, %c7, %c0_38, %c0_39] : memref<1x8x3x128xf32, #tpu.memory_space<vmem>>, vector<1x1x3x128xf32>
    %153 = vector.shape_cast %152 : vector<1x1x3x128xf32> to vector<3x128xf32>
    %154 = vector.extract_strided_slice %151 {offsets = [0, 0], sizes = [32, 128], strides = [1, 1]} : vector<96x128xf32> to vector<32x128xf32>
    %155 = vector.extract_strided_slice %153 {offsets = [0, 0], sizes = [1, 128], strides = [1, 1]} : vector<3x128xf32> to vector<1x128xf32>
    %156 = vector.broadcast %155 : vector<1x128xf32> to vector<32x128xf32>
    %157 = arith.mulf %154, %156 : vector<32x128xf32>
    %158 = vector.extract_strided_slice %151 {offsets = [32, 0], sizes = [32, 128], strides = [1, 1]} : vector<96x128xf32> to vector<32x128xf32>
    %159 = vector.extract_strided_slice %153 {offsets = [1, 0], sizes = [1, 128], strides = [1, 1]} : vector<3x128xf32> to vector<1x128xf32>
    %160 = vector.broadcast %159 : vector<1x128xf32> to vector<32x128xf32>
    %161 = arith.mulf %158, %160 : vector<32x128xf32>
    %162 = arith.addf %157, %161 : vector<32x128xf32>
    %163 = vector.extract_strided_slice %151 {offsets = [64, 0], sizes = [32, 128], strides = [1, 1]} : vector<96x128xf32> to vector<32x128xf32>
    %164 = vector.extract_strided_slice %153 {offsets = [2, 0], sizes = [1, 128], strides = [1, 1]} : vector<3x128xf32> to vector<1x128xf32>
    %165 = vector.broadcast %164 : vector<1x128xf32> to vector<32x128xf32>
    %166 = arith.mulf %163, %165 : vector<32x128xf32>
    %167 = arith.addf %162, %166 : vector<32x128xf32>
    %168 = arith.maximumf %149, %167 : vector<32x128xf32>
    %c0_40 = arith.constant 0 : index
    %c0_41 = arith.constant 0 : index
    %c0_42 = arith.constant 0 : index
    %169 = vector.load %arg8[%c0_40, %c0_41, %c0_42] : memref<1x32x128xf32, #tpu.memory_space<vmem>>, vector<1x32x128xf32>
    %170 = vector.shape_cast %169 : vector<1x32x128xf32> to vector<32x128xf32>
    %171 = vector.shape_cast %168 : vector<32x128xf32> to vector<1x32x128xf32>
    tpu.vector_store %arg8[%c0_40, %c0_41, %c0_42], %171 {strides = array<i32>} : memref<1x32x128xf32, #tpu.memory_space<vmem>>, vector<1x32x128xf32>,
    return
  }
  func.func @transform_0(%arg0: i32, %arg1: i32) -> (i32, i32, i32) {
    %c0_i32 = arith.constant 0 : i32
    %c0_i32_0 = arith.constant 0 : i32
    %c0_i32_1 = arith.constant 0 : i32
    return %arg0, %c0_i32, %c0_i32_0 : i32, i32, i32
  }
  func.func @transform_1(%arg0: i32, %arg1: i32) -> (i32, i32, i32) {
    %c0_i32 = arith.constant 0 : i32
    %c0_i32_0 = arith.constant 0 : i32
    return %arg0, %c0_i32, %arg1 : i32, i32, i32
  }
  func.func @transform_2(%arg0: i32, %arg1: i32) -> (i32, i32, i32, i32) {
    %c0_i32 = arith.constant 0 : i32
    %c0_i32_0 = arith.constant 0 : i32
    %c0_i32_1 = arith.constant 0 : i32
    return %arg0, %arg1, %c0_i32, %c0_i32_0 : i32, i32, i32, i32
  }
  func.func @transform_3(%arg0: i32, %arg1: i32) -> (i32, i32, i32, i32) {
    %c0_i32 = arith.constant 0 : i32
    %c0_i32_0 = arith.constant 0 : i32
    %c0_i32_1 = arith.constant 0 : i32
    return %arg0, %c0_i32, %c0_i32_0, %arg1 : i32, i32, i32, i32
  }
  func.func @transform_4(%arg0: i32, %arg1: i32) -> (i32, i32) {
    %c0_i32 = arith.constant 0 : i32
    %c0_i32_0 = arith.constant 0 : i32
    %c0_i32_1 = arith.constant 0 : i32
    return %c0_i32, %c0_i32_0 : i32, i32
  }
  func.func @transform_5(%arg0: i32, %arg1: i32) -> (i32, i32) {
    %c0_i32 = arith.constant 0 : i32
    %c0_i32_0 = arith.constant 0 : i32
    %c0_i32_1 = arith.constant 0 : i32
    return %c0_i32, %c0_i32_0 : i32, i32
  }
  func.func @transform_6(%arg0: i32, %arg1: i32) -> (i32, i32, i32) {
    %c0_i32 = arith.constant 0 : i32
    %c0_i32_0 = arith.constant 0 : i32
    return %arg0, %c0_i32, %arg1 : i32, i32, i32
  }
}

</mosaic_0001>

<llo_original>
// kernel: tpu_custom_call.1
$region0: #{tpu_custom_call.1}
  #allocation0 [shape = 'u32[]', space=smem, size = 0x4, offset = 0x4, fixed_abs, tag = 'smem constant byte address 0x4 - core index']
  #allocation1 [shape = 'u32[144,128]{1,0:T(1,128)}', space=vmem, size = 0x12000, scoped, tag = 'internal scratch']
  %s0 = inlined_call_operand.vmem [shape: bf16[2,4,128], index: 0, kind: input, shape index: {}]
  %s1 = inlined_call_operand.vmem [shape: bf16[2,4,128], index: 1, kind: input, shape index: {}]
  %s2 = inlined_call_operand.vmem [shape: s32[2,1,1,1024], index: 2, kind: input, shape index: {}]
  %s3 = inlined_call_operand.vmem [shape: f32[2,8,3,128], index: 3, kind: input, shape index: {}]
  %s4 = inlined_call_operand.vmem [shape: bf16[96,4], index: 4, kind: input, shape index: {}]
  %s5 = inlined_call_operand.vmem [shape: bf16[96,4], index: 5, kind: input, shape index: {}]
  %s6 = inlined_call_operand.hbm [shape: f32[2,32,128], index: 6, kind: output, shape index: {}]
  %s7 = sld [smem:[#allocation0]]
  $region57: #{tpu_custom_call.1} parent=0
    _
  %s9 = ssub.s32 1, %s7
  %s10 = scalar_select 0, %s9, %s7
  $region1: #{tpu_custom_call.1} parent=0
    #allocation2 [shape = 'u8[32768]{0}', space=vmem, size = 0x8000, scoped, tag = 'output window, operand 0']
    #allocation3 [shape = 's32[2]{0}', space=sflag, size = 0x8, scoped, tag = 'scoped memory for tpu_custom_call.1']
    %11 = vsyncpa [#allocation3], 0
    %s12 = scalar_lea.sflag [#allocation3], 1
    %13 = vsyncpa %s12, 0
    loop: start=0, step=1, limit=4
    $region2: #{tpu_custom_call.1} parent=1 // loop_pre_header
      _
    $region3: #{tpu_custom_call.1} parent=1 // loop_header
      %s15 = sphi 0, %s19
      %p16 = scmp.ge.s32.totalorder %s15, 4
      %s22 = sphi 0, %s34
      %s23 = sphi 0, %s30
      %s24 = sphi 0, %s22
      %s25 = sphi 0, %s23
      %s26 = sphi 0, %s24
      %s27 = sphi 0, %s25
      %s37 = sphi 0, %s39
      %s40 = sphi 0, %s37
      %s41 = sphi 0, %s40
      %s57 = sphi 0, %s41
      %s65 = sphi 0, %s67
      %s68 = sphi 0, %s65
      %s69 = sphi 0, %s68
      %s85 = sphi 0, %s69
      %s93 = sphi 0, %s95
      %s96 = sphi 0, %s93
      %s97 = sphi 0, %s96
      %s113 = sphi 0, %s97
      %s121 = sphi 0, %s123
      %s124 = sphi 0, %s121
      %s125 = sphi 0, %s124
      %s141 = sphi 0, %s125
      %s145 = sphi 0, %s145
      %s147 = sphi 0, %s145
      %s148 = sphi 0, %s147
      %s162 = sphi 0, %s148
      %s166 = sphi 0, %s166
      %s168 = sphi 0, %s166
      %s169 = sphi 0, %s168
      %s183 = sphi 0, %s169
      %s191 = sphi 0, %s193
      %s194 = sphi 0, %s191
      %s195 = sphi 0, %s194
      %s211 = sphi 0, %s195
    $region4: #{tpu_custom_call.1} parent=1 // loop_header_branch
      %18 = sbr.rel (%p16) target = $region8
    $region5: #{tpu_custom_call.1} parent=1 // loop_body
      %s20 = ssub.s32 %s15, 1
      %s21 = ssub.s32 %s15, 2
      %s28 = sadd.s32 1, %s23
      %p29 = scmp.ge.s32.totalorder %s28, 1
      %s30 = scalar_select %p29, 0, %s28
      %s31 = sadd.s32 1, %s22
      %s32 = scalar_select %p29, %s31, %s22
      %p33 = scmp.ge.s32.totalorder %s32, 2
      %s34 = scalar_select %p33, 0, %s32
      %s35 = ssub.s32 %s22, %s34
      %p36 = scmp.eq.s32.totalorder %s35, 0
      %s38 = sadd.s32 %s37, 1
      %s39 = scalar_select %p36, %s37, %s38
      %p42 = pneg %p36
      %p43 = scmp.eq.s32.totalorder %s15, 1
      %p44 = por %p42, %p43
      %p45 = scmp.ne.s32.totalorder %s37, %s40
      %p46 = scmp.eq.s32.totalorder %s15, 0
      %p47 = por %p45, %p46
      %p48 = scmp.ne.s32.totalorder %s37, %s40
      %p49 = scmp.eq.s32.totalorder %s20, 1
      %p50 = por %p48, %p49
      %p51 = scmp.ne.s32.totalorder %s40, %s41
      %p52 = scmp.eq.s32.totalorder %s20, 0
      %p53 = por %p51, %p52
      %p54 = scmp.ne.s32.totalorder %s40, %s41
      %p55 = scmp.eq.s32.totalorder %s21, 1
      %p56 = por %p54, %p55
      %p58 = scmp.ne.s32.totalorder %s41, %s57
      %p59 = scmp.eq.s32.totalorder %s21, 0
      %p60 = por %p58, %p59
      %s61 = ssub.s32 %s22, %s34
      %s62 = ssub.s32 %s23, %s30
      %s63 = sor.u32 %s61, %s62
      %p64 = scmp.eq.s32.totalorder %s63, 0
      %s66 = sadd.s32 %s65, 1
      %s67 = scalar_select %p64, %s65, %s66
      %p70 = pneg %p64
      %p71 = scmp.eq.s32.totalorder %s15, 1
      %p72 = por %p70, %p71
      %p73 = scmp.ne.s32.totalorder %s65, %s68
      %p74 = scmp.eq.s32.totalorder %s15, 0
      %p75 = por %p73, %p74
      %p76 = scmp.ne.s32.totalorder %s65, %s68
      %p77 = scmp.eq.s32.totalorder %s20, 1
      %p78 = por %p76, %p77
      %p79 = scmp.ne.s32.totalorder %s68, %s69
      %p80 = scmp.eq.s32.totalorder %s20, 0
      %p81 = por %p79, %p80
      %p82 = scmp.ne.s32.totalorder %s68, %s69
      %p83 = scmp.eq.s32.totalorder %s21, 1
      %p84 = por %p82, %p83
      %p86 = scmp.ne.s32.totalorder %s69, %s85
      %p87 = scmp.eq.s32.totalorder %s21, 0
      %p88 = por %p86, %p87
      %s89 = ssub.s32 %s22, %s34
      %s90 = ssub.s32 %s23, %s30
      %s91 = sor.u32 %s89, %s90
      %p92 = scmp.eq.s32.totalorder %s91, 0
      %s94 = sadd.s32 %s93, 1
      %s95 = scalar_select %p92, %s93, %s94
      %p98 = pneg %p92
      %p99 = scmp.eq.s32.totalorder %s15, 1
      %p100 = por %p98, %p99
      %p101 = scmp.ne.s32.totalorder %s93, %s96
      %p102 = scmp.eq.s32.totalorder %s15, 0
      %p103 = por %p101, %p102
      %p104 = scmp.ne.s32.totalorder %s93, %s96
      %p105 = scmp.eq.s32.totalorder %s20, 1
      %p106 = por %p104, %p105
      %p107 = scmp.ne.s32.totalorder %s96, %s97
      %p108 = scmp.eq.s32.totalorder %s20, 0
      %p109 = por %p107, %p108
      %p110 = scmp.ne.s32.totalorder %s96, %s97
      %p111 = scmp.eq.s32.totalorder %s21, 1
      %p112 = por %p110, %p111
      %p114 = scmp.ne.s32.totalorder %s97, %s113
      %p115 = scmp.eq.s32.totalorder %s21, 0
      %p116 = por %p114, %p115
      %s117 = ssub.s32 %s22, %s34
      %s118 = ssub.s32 %s23, %s30
      %s119 = sor.u32 %s117, %s118
      %p120 = scmp.eq.s32.totalorder %s119, 0
      %s122 = sadd.s32 %s121, 1
      %s123 = scalar_select %p120, %s121, %s122
      %p126 = pneg %p120
      %p127 = scmp.eq.s32.totalorder %s15, 1
      %p128 = por %p126, %p127
      %p129 = scmp.ne.s32.totalorder %s121, %s124
      %p130 = scmp.eq.s32.totalorder %s15, 0
      %p131 = por %p129, %p130
      %p132 = scmp.ne.s32.totalorder %s121, %s124
      %p133 = scmp.eq.s32.totalorder %s20, 1
      %p134 = por %p132, %p133
      %p135 = scmp.ne.s32.totalorder %s124, %s125
      %p136 = scmp.eq.s32.totalorder %s20, 0
      %p137 = por %p135, %p136
      %p138 = scmp.ne.s32.totalorder %s124, %s125
      %p139 = scmp.eq.s32.totalorder %s21, 1
      %p140 = por %p138, %p139
      %p142 = scmp.ne.s32.totalorder %s125, %s141
      %p143 = scmp.eq.s32.totalorder %s21, 0
      %p144 = por %p142, %p143
      %s146 = sadd.s32 %s145, 1
      %p149 = scmp.eq.s32.totalorder %s15, 1
      %p150 = scmp.ne.s32.totalorder %s145, %s147
      %p151 = scmp.eq.s32.totalorder %s15, 0
      %p152 = por %p150, %p151
      %p153 = scmp.ne.s32.totalorder %s145, %s147
      %p154 = scmp.eq.s32.totalorder %s20, 1
      %p155 = por %p153, %p154
      %p156 = scmp.ne.s32.totalorder %s147, %s148
      %p157 = scmp.eq.s32.totalorder %s20, 0
      %p158 = por %p156, %p157
      %p159 = scmp.ne.s32.totalorder %s147, %s148
      %p160 = scmp.eq.s32.totalorder %s21, 1
      %p161 = por %p159, %p160
      %p163 = scmp.ne.s32.totalorder %s148, %s162
      %p164 = scmp.eq.s32.totalorder %s21, 0
      %p165 = por %p163, %p164
      %s167 = sadd.s32 %s166, 1
      %p170 = scmp.eq.s32.totalorder %s15, 1
      %p171 = scmp.ne.s32.totalorder %s166, %s168
      %p172 = scmp.eq.s32.totalorder %s15, 0
      %p173 = por %p171, %p172
      %p174 = scmp.ne.s32.totalorder %s166, %s168
      %p175 = scmp.eq.s32.totalorder %s20, 1
      %p176 = por %p174, %p175
      %p177 = scmp.ne.s32.totalorder %s168, %s169
      %p178 = scmp.eq.s32.totalorder %s20, 0
      %p179 = por %p177, %p178
      %p180 = scmp.ne.s32.totalorder %s168, %s169
      %p181 = scmp.eq.s32.totalorder %s21, 1
      %p182 = por %p180, %p181
      %p184 = scmp.ne.s32.totalorder %s169, %s183
      %p185 = scmp.eq.s32.totalorder %s21, 0
      %p186 = por %p184, %p185
      %s187 = ssub.s32 %s22, %s34
      %s188 = ssub.s32 %s23, %s30
      %s189 = sor.u32 %s187, %s188
      %p190 = scmp.eq.s32.totalorder %s189, 0
      %s192 = sadd.s32 %s191, 1
      %s193 = scalar_select %p190, %s191, %s192
      %p196 = pneg %p190
      %p197 = scmp.eq.s32.totalorder %s15, 1
      %p198 = por %p196, %p197
      %p199 = scmp.ne.s32.totalorder %s191, %s194
      %p200 = scmp.eq.s32.totalorder %s15, 0
      %p201 = por %p199, %p200
      %p202 = scmp.ne.s32.totalorder %s191, %s194
      %p203 = scmp.eq.s32.totalorder %s20, 1
      %p204 = por %p202, %p203
      %p205 = scmp.ne.s32.totalorder %s194, %s195
      %p206 = scmp.eq.s32.totalorder %s20, 0
      %p207 = por %p205, %p206
      %p208 = scmp.ne.s32.totalorder %s194, %s195
      %p209 = scmp.eq.s32.totalorder %s21, 1
      %p210 = por %p208, %p209
      %p212 = scmp.ne.s32.totalorder %s195, %s211
      %p213 = scmp.eq.s32.totalorder %s21, 0
      %p214 = por %p212, %p213
      %p215 = scmp.le.s32.totalorder 1, %s15
      %p216 = scmp.lt.s32.totalorder %s15, 3
      %p217 = pnand %p215, %p216
      %p218 = pneg %p217
      // Predicated region
      $region9: #{tpu_custom_call.1} parent=5 // pred_check
        _
      $region10: #{tpu_custom_call.1} parent=5 // pred_check_branch
        %220 = sbr.rel (%p217) target = $region12
      $region11: #{tpu_custom_call.1} parent=5 // pred_region
        %s221 = ssub.s32 %s15, 1
        // Predicated region
        $region13: #{tpu_custom_call.1} parent=11 // pred_check
          %p222 = pneg %p158
        $region14: #{tpu_custom_call.1} parent=11 // pred_check_branch
          %224 = sbr.rel (%p222) target = $region16
        $region15: #{tpu_custom_call.1} parent=11 // pred_region
          _
        $region16: #{tpu_custom_call.1} parent=11 // pred_fallthru
          _
        // Predicated region
        $region17: #{tpu_custom_call.1} parent=11 // pred_check
          %p225 = pneg %p179
        $region18: #{tpu_custom_call.1} parent=11 // pred_check_branch
          %227 = sbr.rel (%p225) target = $region20
        $region19: #{tpu_custom_call.1} parent=11 // pred_region
          _
        $region20: #{tpu_custom_call.1} parent=11 // pred_fallthru
          _
      $region12: #{tpu_custom_call.1} parent=5 // pred_fallthru
        _
      %p228 = scmp.lt.s32.totalorder %s15, 2
      // Predicated region
      $region21: #{tpu_custom_call.1} parent=5 // pred_check
        %p229 = pneg %p228
      $region22: #{tpu_custom_call.1} parent=5 // pred_check_branch
        %231 = sbr.rel (%p229) target = $region24
      $region23: #{tpu_custom_call.1} parent=5 // pred_region
        // Predicated region
        $region25: #{tpu_custom_call.1} parent=23 // pred_check
          %p232 = pneg %p47
        $region26: #{tpu_custom_call.1} parent=23 // pred_check_branch
          %234 = sbr.rel (%p232) target = $region28
        $region27: #{tpu_custom_call.1} parent=23 // pred_region
          %p235 = scmp.lt.s32.totalorder %s22, 1
          %s236 = scalar_select %p235, %s22, 1
          %s237 = smul.addr %s236, 2
          %s238 = scalar_lea.vmem %s0, %s237
        $region28: #{tpu_custom_call.1} parent=23 // pred_fallthru
          _
        // Predicated region
        $region29: #{tpu_custom_call.1} parent=23 // pred_check
          %p239 = pneg %p75
        $region30: #{tpu_custom_call.1} parent=23 // pred_check_branch
          %241 = sbr.rel (%p239) target = $region32
        $region31: #{tpu_custom_call.1} parent=23 // pred_region
          %p242 = scmp.lt.s32.totalorder %s22, 1
          %s243 = scalar_select %p242, %s22, 1
          %p244 = scmp.lt.s32.totalorder %s23, 0
          %s245 = scalar_select %p244, %s23, 0
          %s246 = sadd.s32 %s245, %s243
          %s247 = smul.addr %s246, 2
          %s248 = scalar_lea.vmem %s1, %s247
        $region32: #{tpu_custom_call.1} parent=23 // pred_fallthru
          _
        // Predicated region
        $region33: #{tpu_custom_call.1} parent=23 // pred_check
          %p249 = pneg %p103
        $region34: #{tpu_custom_call.1} parent=23 // pred_check_branch
          %251 = sbr.rel (%p249) target = $region36
        $region35: #{tpu_custom_call.1} parent=23 // pred_region
          %p252 = scmp.lt.s32.totalorder %s22, 1
          %s253 = scalar_select %p252, %s22, 1
          %p254 = scmp.lt.s32.totalorder %s23, 0
          %s255 = scalar_select %p254, %s23, 0
          %s256 = smul.addr %s255, 8
          %s257 = smul.addr %s253, 8
          %s258 = sadd.s32 %s256, %s257
          %s259 = scalar_lea.vmem %s2, %s258
        $region36: #{tpu_custom_call.1} parent=23 // pred_fallthru
          _
        // Predicated region
        $region37: #{tpu_custom_call.1} parent=23 // pred_check
          %p260 = pneg %p131
        $region38: #{tpu_custom_call.1} parent=23 // pred_check_branch
          %262 = sbr.rel (%p260) target = $region40
        $region39: #{tpu_custom_call.1} parent=23 // pred_region
          %p263 = scmp.lt.s32.totalorder %s22, 1
          %s264 = scalar_select %p263, %s22, 1
          %p265 = scmp.lt.s32.totalorder %s23, 0
          %s266 = scalar_select %p265, %s23, 0
          %s267 = smul.addr %s264, 8
          %s268 = sadd.s32 %s266, %s267
          %s269 = smul.addr %s268, 4
          %s270 = scalar_lea.vmem %s3, %s269
        $region40: #{tpu_custom_call.1} parent=23 // pred_fallthru
          _
      $region24: #{tpu_custom_call.1} parent=5 // pred_fallthru
        _
      %p271 = scmp.le.s32.totalorder 1, %s15
      %p272 = scmp.lt.s32.totalorder %s15, 3
      %p273 = pnand %p271, %p272
      %p274 = pneg %p273
      // Predicated region
      $region41: #{tpu_custom_call.1} parent=5 // pred_check
        _
      $region42: #{tpu_custom_call.1} parent=5 // pred_check_branch
        %276 = sbr.rel (%p273) target = $region44
      $region43: #{tpu_custom_call.1} parent=5 // pred_region
        %s277 = ssub.s32 %s15, 1
        %p278 = scmp.lt.s32.totalorder %s24, 1
        %s279 = scalar_select %p278, %s24, 1
        %s280 = smul.addr %s279, 2
        %s281 = scalar_lea.vmem %s0, %s280
        %p282 = pneg %p53
        %p283 = pneg %p50
        %p284 = scmp.lt.s32.totalorder %s24, 1
        %s285 = scalar_select %p284, %s24, 1
        %p286 = scmp.lt.s32.totalorder %s25, 0
        %s287 = scalar_select %p286, %s25, 0
        %s288 = sadd.s32 %s287, %s285
        %s289 = smul.addr %s288, 2
        %s290 = scalar_lea.vmem %s1, %s289
        %p291 = pneg %p81
        %p292 = pneg %p78
        %p293 = scmp.lt.s32.totalorder %s24, 1
        %s294 = scalar_select %p293, %s24, 1
        %p295 = scmp.lt.s32.totalorder %s25, 0
        %s296 = scalar_select %p295, %s25, 0
        %s297 = smul.addr %s296, 8
        %s298 = smul.addr %s294, 8
        %s299 = sadd.s32 %s297, %s298
        %s300 = scalar_lea.vmem %s2, %s299
        %p301 = pneg %p109
        %p302 = pneg %p106
        %p303 = scmp.lt.s32.totalorder %s24, 1
        %s304 = scalar_select %p303, %s24, 1
        %p305 = scmp.lt.s32.totalorder %s25, 0
        %s306 = scalar_select %p305, %s25, 0
        %s307 = smul.addr %s304, 8
        %s308 = sadd.s32 %s306, %s307
        %s309 = smul.addr %s308, 4
        %s310 = scalar_lea.vmem %s3, %s309
        %p311 = pneg %p137
        %p312 = pneg %p134
        %p313 = pneg %p158
        %p314 = pneg %p155
        %p315 = pneg %p179
        %p316 = pneg %p176
        %p317 = pneg %p207
        %p318 = pneg %p204
        %s319 = sand.u32 %s194, 1
        %s320 = scalar_lea.sflag [#allocation3], %s319
        %s321 = sand.u32 %s194, 1
        %s322 = smul.addr %s321, 32
        %s323 = scalar_lea.vmem [#allocation2], %s322
        %p324 = scmp.lt.s32.totalorder %s24, 1
        %s325 = scalar_select %p324, %s24, 1
        %s326 = smul.addr %s325, 2
        %s327 = scalar_lea.vmem %s0, %s326
        %p328 = scmp.lt.s32.totalorder %s24, 1
        %s329 = scalar_select %p328, %s24, 1
        %p330 = scmp.lt.s32.totalorder %s25, 0
        %s331 = scalar_select %p330, %s25, 0
        %s332 = sadd.s32 %s331, %s329
        %s333 = smul.addr %s332, 2
        %s334 = scalar_lea.vmem %s1, %s333
        %p335 = scmp.lt.s32.totalorder %s24, 1
        %s336 = scalar_select %p335, %s24, 1
        %p337 = scmp.lt.s32.totalorder %s25, 0
        %s338 = scalar_select %p337, %s25, 0
        %s339 = smul.addr %s338, 8
        %s340 = smul.addr %s336, 8
        %s341 = sadd.s32 %s339, %s340
        %s342 = scalar_lea.vmem %s2, %s341
        %p343 = scmp.lt.s32.totalorder %s24, 1
        %s344 = scalar_select %p343, %s24, 1
        %p345 = scmp.lt.s32.totalorder %s25, 0
        %s346 = scalar_select %p345, %s25, 0
        %s347 = smul.addr %s344, 8
        %s348 = sadd.s32 %s346, %s347
        %s349 = smul.addr %s348, 4
        %s350 = scalar_lea.vmem %s3, %s349
        %v352 = vld [vmem:[%s327] sm:$0x3]
        %v353 = vld [vmem:[%s4] sm:$0xf]
        %v354 = vld [vmem:[%s4 + $0x4] sm:$0xf]
        %v355 = vld [vmem:[%s4 + $0x8] sm:$0xf]
        %v356 = vld [vmem:[%s4 + $0xc] sm:$0xf]
        %v357 = vld [vmem:[%s4 + $0x10] sm:$0xf]
        %v358 = vld [vmem:[%s4 + $0x14] sm:$0xf]
        %v359 = vld [vmem:[%s4 + $0x18] sm:$0xf]
        %v360 = vld [vmem:[%s4 + $0x1c] sm:$0xf]
        %v361 = vld [vmem:[%s4 + $0x20] sm:$0xf]
        %v362 = vld [vmem:[%s4 + $0x24] sm:$0xf]
        %v363 = vld [vmem:[%s4 + $0x28] sm:$0xf]
        %v364 = vld [vmem:[%s4 + $0x2c] sm:$0xf]
        %v365 = vld [vmem:[%s334] sm:$0x3]
        %v378 = vunpack.c.l.b16 %v353
        %v379 = vunpack.c.l.b16 %v354
        %v380 = vunpack.c.l.b16 %v355
        %v381 = vunpack.c.l.b16 %v356
        %v382 = vunpack.c.l.b16 %v357
        %v383 = vunpack.c.l.b16 %v358
        %v384 = vunpack.c.l.b16 %v359
        %v385 = vunpack.c.l.b16 %v360
        %v386 = vunpack.c.l.b16 %v361
        %v387 = vunpack.c.l.b16 %v362
        %v388 = vunpack.c.l.b16 %v363
        %v389 = vunpack.c.l.b16 %v364
        %v390 = vpack.c.b16 %v379, %v378
        %v391 = vpack.c.b16 %v381, %v380
        %v392 = vpack.c.b16 %v383, %v382
        %v393 = vpack.c.b16 %v385, %v384
        %v394 = vpack.c.b16 %v387, %v386
        %v395 = vpack.c.b16 %v389, %v388
        %vm396 = vcmask 31744
        %v398 = vsel %vm396, %v390, 0
        %v401 = vsel %vm396, %v391, 0
        %v404 = vsel %vm396, %v392, 0
        %v407 = vsel %vm396, %v393, 0
        %v410 = vsel %vm396, %v394, 0
        %v413 = vsel %vm396, %v395, 0
        %vm415 = vcmask 1041408
        %v417 = vsel %vm415, %v365, 0
        %419 = vmatprep.subr.bf16.mxu0 0
        %420 = vmatpush1.bf16.msra.mxu0 %v417
        %421 = vmatprep.subr.bf16.mxu0 0
        %422 = vmatpush1.bf16.msra.mxu0 0
        %423 = vmatprep.subr.bf16.mxu0 0
        %424 = vmatpush1.bf16.msra.mxu0 0
        %425 = vmatprep.subr.bf16.mxu0 0
        %426 = vmatpush1.bf16.msra.mxu0 0
        %427 = vmatprep.subr.bf16.mxu0 0
        %428 = vmatpush1.bf16.msra.mxu0 0
        %429 = vmatprep.subr.bf16.mxu0 0
        %430 = vmatpush1.bf16.msra.mxu0 0
        %431 = vmatprep.subr.bf16.mxu0 0
        %432 = vmatpush1.bf16.msra.mxu0 0
        %433 = vmatprep.subr.bf16.mxu0 0
        %434 = vmatpush1.bf16.msra.mxu0 0
        %435 = vmatprep.subr.bf16.mxu0 0
        %436 = vmatpush1.bf16.msra.mxu0 0
        %437 = vmatprep.subr.bf16.mxu0 0
        %438 = vmatpush1.bf16.msra.mxu0 0
        %439 = vmatprep.subr.bf16.mxu0 0
        %440 = vmatpush1.bf16.msra.mxu0 0
        %441 = vmatprep.subr.bf16.mxu0 0
        %442 = vmatpush1.bf16.msra.mxu0 0
        %443 = vmatprep.subr.bf16.mxu0 0
        %444 = vmatpush1.bf16.msra.mxu0 0
        %445 = vmatprep.subr.bf16.mxu0 0
        %446 = vmatpush1.bf16.msra.mxu0 0
        %447 = vmatprep.subr.bf16.mxu0 0
        %448 = vmatpush1.bf16.msra.mxu0 0
        %449 = vmatprep.subr.bf16.mxu0 0
        %450 = vmatpush1.bf16.msra.mxu0 0
        %451 = vmatprep.mubr.bf16.mxu0 0
        %452 = vmatmul.mubr.bf16.gmra.mrb[0].mxu0 %v398
        %v453 = vpop.f32.mrb[0].mxu0
        %v454 = vadd.f32 0.0, %v453
        %v455 = vpop.f32.mrb[0].mxu0
        %v456 = vpop.f32.mrb[0].mxu0
        %v457 = vadd.f32 0.0, %v456
        %v458 = vpop.f32.mrb[0].mxu0
        %459 = vmatprep.mubr.bf16.mxu0 0
        %460 = vmatmul.mubr.bf16.gmra.mrb[0].mxu0 %v401
        %v461 = vpop.f32.mrb[0].mxu0
        %v462 = vadd.f32 0.0, %v461
        %v463 = vpop.f32.mrb[0].mxu0
        %v464 = vpop.f32.mrb[0].mxu0
        %v465 = vadd.f32 0.0, %v464
        %v466 = vpop.f32.mrb[0].mxu0
        %467 = vmatprep.mubr.bf16.mxu0 0
        %468 = vmatmul.mubr.bf16.gmra.mrb[0].mxu0 %v404
        %v469 = vpop.f32.mrb[0].mxu0
        %v470 = vadd.f32 0.0, %v469
        %v471 = vpop.f32.mrb[0].mxu0
        %v472 = vpop.f32.mrb[0].mxu0
        %v473 = vadd.f32 0.0, %v472
        %v474 = vpop.f32.mrb[0].mxu0
        %475 = vmatprep.mubr.bf16.mxu0 0
        %476 = vmatmul.mubr.bf16.gmra.mrb[0].mxu0 %v407
        %v477 = vpop.f32.mrb[0].mxu0
        %v478 = vadd.f32 0.0, %v477
        %v479 = vpop.f32.mrb[0].mxu0
        %v480 = vpop.f32.mrb[0].mxu0
        %v481 = vadd.f32 0.0, %v480
        %v482 = vpop.f32.mrb[0].mxu0
        %483 = vmatprep.mubr.bf16.mxu0 0
        %484 = vmatmul.mubr.bf16.gmra.mrb[0].mxu0 %v410
        %v485 = vpop.f32.mrb[0].mxu0
        %v486 = vadd.f32 0.0, %v485
        %v487 = vpop.f32.mrb[0].mxu0
        %v488 = vpop.f32.mrb[0].mxu0
        %v489 = vadd.f32 0.0, %v488
        %v490 = vpop.f32.mrb[0].mxu0
        %491 = vmatprep.mubr.bf16.mxu0 0
        %492 = vmatmul.mubr.bf16.gmra.mrb[0].mxu0 %v413
        %v493 = vpop.f32.mrb[0].mxu0
        %v494 = vadd.f32 0.0, %v493
        %v495 = vpop.f32.mrb[0].mxu0
        %v496 = vpop.f32.mrb[0].mxu0
        %v497 = vadd.f32 0.0, %v496
        %v498 = vpop.f32.mrb[0].mxu0
        %499 = vdwg.mxu0
        %v500 = vld [vmem:[%s342] sm:$0xff]
        %v501 = vlaneseq
        %v502 = vshrl.u32 %v501, 7
        %v503 = vadd.s32 %v502, 8
        %v504 = vadd.s32 %v502, 16
        %v505 = vadd.s32 %v502, 24
        %v506 = vadd.s32 %v502, 32
        %v507 = vadd.s32 %v502, 40
        %v508 = vadd.s32 %v502, 48
        %v509 = vadd.s32 %v502, 56
        %v510 = vadd.s32 %v502, 64
        %v511 = vadd.s32 %v502, 72
        %v512 = vadd.s32 %v502, 80
        %v513 = vadd.s32 %v502, 88
        %v514 = vadd.s32 %v502, 96
        %v515 = vadd.s32 %v502, 104
        %v516 = vadd.s32 %v502, 112
        %v517 = vadd.s32 %v502, 120
        %v518 = vlaneseq
        %v519 = vshrl.u32 %v518, 7
        %v520 = vsub.s32 0, %v519
        %v521 = vrot.slane %v500, %v520
        %v522 = vlaneseq
        %v523 = vshrl.u32 %v522, 7
        %v524 = vsub.s32 1, %v523
        %v525 = vrot.slane %v500, %v524
        %v526 = vlaneseq
        %v527 = vshrl.u32 %v526, 7
        %v528 = vsub.s32 2, %v527
        %v529 = vrot.slane %v500, %v528
        %v530 = vlaneseq
        %v531 = vshrl.u32 %v530, 7
        %v532 = vsub.s32 3, %v531
        %v533 = vrot.slane %v500, %v532
        %v534 = vlaneseq
        %v535 = vshrl.u32 %v534, 7
        %v536 = vsub.s32 4, %v535
        %v537 = vrot.slane %v500, %v536
        %v538 = vlaneseq
        %v539 = vshrl.u32 %v538, 7
        %v540 = vsub.s32 5, %v539
        %v541 = vrot.slane %v500, %v540
        %v542 = vlaneseq
        %v543 = vshrl.u32 %v542, 7
        %v544 = vsub.s32 6, %v543
        %v545 = vrot.slane %v500, %v544
        %v546 = vlaneseq
        %v547 = vshrl.u32 %v546, 7
        %v548 = vsub.s32 7, %v547
        %v549 = vrot.slane %v500, %v548
        %vm550 = vcmp.eq.s32.totalorder %v502, %v521
        %vm551 = vcmp.eq.s32.totalorder %v502, %v525
        %vm552 = vcmp.eq.s32.totalorder %v502, %v529
        %vm553 = vcmp.eq.s32.totalorder %v502, %v533
        %vm554 = vcmp.eq.s32.totalorder %v502, %v537
        %vm555 = vcmp.eq.s32.totalorder %v502, %v541
        %vm556 = vcmp.eq.s32.totalorder %v502, %v545
        %vm557 = vcmp.eq.s32.totalorder %v502, %v549
        %vm558 = vcmp.eq.s32.totalorder %v503, %v521
        %vm559 = vcmp.eq.s32.totalorder %v503, %v525
        %vm560 = vcmp.eq.s32.totalorder %v503, %v529
        %vm561 = vcmp.eq.s32.totalorder %v503, %v533
        %vm562 = vcmp.eq.s32.totalorder %v503, %v537
        %vm563 = vcmp.eq.s32.totalorder %v503, %v541
        %vm564 = vcmp.eq.s32.totalorder %v503, %v545
        %vm565 = vcmp.eq.s32.totalorder %v503, %v549
        %vm566 = vcmp.eq.s32.totalorder %v504, %v521
        %vm567 = vcmp.eq.s32.totalorder %v504, %v525
        %vm568 = vcmp.eq.s32.totalorder %v504, %v529
        %vm569 = vcmp.eq.s32.totalorder %v504, %v533
        %vm570 = vcmp.eq.s32.totalorder %v504, %v537
        %vm571 = vcmp.eq.s32.totalorder %v504, %v541
        %vm572 = vcmp.eq.s32.totalorder %v504, %v545
        %vm573 = vcmp.eq.s32.totalorder %v504, %v549
        %vm574 = vcmp.eq.s32.totalorder %v505, %v521
        %vm575 = vcmp.eq.s32.totalorder %v505, %v525
        %vm576 = vcmp.eq.s32.totalorder %v505, %v529
        %vm577 = vcmp.eq.s32.totalorder %v505, %v533
        %vm578 = vcmp.eq.s32.totalorder %v505, %v537
        %vm579 = vcmp.eq.s32.totalorder %v505, %v541
        %vm580 = vcmp.eq.s32.totalorder %v505, %v545
        %vm581 = vcmp.eq.s32.totalorder %v505, %v549
        %vm582 = vcmp.eq.s32.totalorder %v506, %v521
        %vm583 = vcmp.eq.s32.totalorder %v506, %v525
        %vm584 = vcmp.eq.s32.totalorder %v506, %v529
        %vm585 = vcmp.eq.s32.totalorder %v506, %v533
        %vm586 = vcmp.eq.s32.totalorder %v506, %v537
        %vm587 = vcmp.eq.s32.totalorder %v506, %v541
        %vm588 = vcmp.eq.s32.totalorder %v506, %v545
        %vm589 = vcmp.eq.s32.totalorder %v506, %v549
        %vm590 = vcmp.eq.s32.totalorder %v507, %v521
        %vm591 = vcmp.eq.s32.totalorder %v507, %v525
        %vm592 = vcmp.eq.s32.totalorder %v507, %v529
        %vm593 = vcmp.eq.s32.totalorder %v507, %v533
        %vm594 = vcmp.eq.s32.totalorder %v507, %v537
        %vm595 = vcmp.eq.s32.totalorder %v507, %v541
        %vm596 = vcmp.eq.s32.totalorder %v507, %v545
        %vm597 = vcmp.eq.s32.totalorder %v507, %v549
        %vm598 = vcmp.eq.s32.totalorder %v508, %v521
        %vm599 = vcmp.eq.s32.totalorder %v508, %v525
        %vm600 = vcmp.eq.s32.totalorder %v508, %v529
        %vm601 = vcmp.eq.s32.totalorder %v508, %v533
        %vm602 = vcmp.eq.s32.totalorder %v508, %v537
        %vm603 = vcmp.eq.s32.totalorder %v508, %v541
        %vm604 = vcmp.eq.s32.totalorder %v508, %v545
        %vm605 = vcmp.eq.s32.totalorder %v508, %v549
        %vm606 = vcmp.eq.s32.totalorder %v509, %v521
        %vm607 = vcmp.eq.s32.totalorder %v509, %v525
        %vm608 = vcmp.eq.s32.totalorder %v509, %v529
        %vm609 = vcmp.eq.s32.totalorder %v509, %v533
        %vm610 = vcmp.eq.s32.totalorder %v509, %v537
        %vm611 = vcmp.eq.s32.totalorder %v509, %v541
        %vm612 = vcmp.eq.s32.totalorder %v509, %v545
        %vm613 = vcmp.eq.s32.totalorder %v509, %v549
        %vm614 = vcmp.eq.s32.totalorder %v510, %v521
        %vm615 = vcmp.eq.s32.totalorder %v510, %v525
        %vm616 = vcmp.eq.s32.totalorder %v510, %v529
        %vm617 = vcmp.eq.s32.totalorder %v510, %v533
        %vm618 = vcmp.eq.s32.totalorder %v510, %v537
        %vm619 = vcmp.eq.s32.totalorder %v510, %v541
        %vm620 = vcmp.eq.s32.totalorder %v510, %v545
        %vm621 = vcmp.eq.s32.totalorder %v510, %v549
        %vm622 = vcmp.eq.s32.totalorder %v511, %v521
        %vm623 = vcmp.eq.s32.totalorder %v511, %v525
        %vm624 = vcmp.eq.s32.totalorder %v511, %v529
        %vm625 = vcmp.eq.s32.totalorder %v511, %v533
        %vm626 = vcmp.eq.s32.totalorder %v511, %v537
        %vm627 = vcmp.eq.s32.totalorder %v511, %v541
        %vm628 = vcmp.eq.s32.totalorder %v511, %v545
        %vm629 = vcmp.eq.s32.totalorder %v511, %v549
        %vm630 = vcmp.eq.s32.totalorder %v512, %v521
        %vm631 = vcmp.eq.s32.totalorder %v512, %v525
        %vm632 = vcmp.eq.s32.totalorder %v512, %v529
        %vm633 = vcmp.eq.s32.totalorder %v512, %v533
        %vm634 = vcmp.eq.s32.totalorder %v512, %v537
        %vm635 = vcmp.eq.s32.totalorder %v512, %v541
        %vm636 = vcmp.eq.s32.totalorder %v512, %v545
        %vm637 = vcmp.eq.s32.totalorder %v512, %v549
        %vm638 = vcmp.eq.s32.totalorder %v513, %v521
        %vm639 = vcmp.eq.s32.totalorder %v513, %v525
        %vm640 = vcmp.eq.s32.totalorder %v513, %v529
        %vm641 = vcmp.eq.s32.totalorder %v513, %v533
        %vm642 = vcmp.eq.s32.totalorder %v513, %v537
        %vm643 = vcmp.eq.s32.totalorder %v513, %v541
        %vm644 = vcmp.eq.s32.totalorder %v513, %v545
        %vm645 = vcmp.eq.s32.totalorder %v513, %v549
        %vm646 = vcmp.eq.s32.totalorder %v514, %v521
        %vm647 = vcmp.eq.s32.totalorder %v514, %v525
        %vm648 = vcmp.eq.s32.totalorder %v514, %v529
        %vm649 = vcmp.eq.s32.totalorder %v514, %v533
        %vm650 = vcmp.eq.s32.totalorder %v514, %v537
        %vm651 = vcmp.eq.s32.totalorder %v514, %v541
        %vm652 = vcmp.eq.s32.totalorder %v514, %v545
        %vm653 = vcmp.eq.s32.totalorder %v514, %v549
        %vm654 = vcmp.eq.s32.totalorder %v515, %v521
        %vm655 = vcmp.eq.s32.totalorder %v515, %v525
        %vm656 = vcmp.eq.s32.totalorder %v515, %v529
        %vm657 = vcmp.eq.s32.totalorder %v515, %v533
        %vm658 = vcmp.eq.s32.totalorder %v515, %v537
        %vm659 = vcmp.eq.s32.totalorder %v515, %v541
        %vm660 = vcmp.eq.s32.totalorder %v515, %v545
        %vm661 = vcmp.eq.s32.totalorder %v515, %v549
        %vm662 = vcmp.eq.s32.totalorder %v516, %v521
        %vm663 = vcmp.eq.s32.totalorder %v516, %v525
        %vm664 = vcmp.eq.s32.totalorder %v516, %v529
        %vm665 = vcmp.eq.s32.totalorder %v516, %v533
        %vm666 = vcmp.eq.s32.totalorder %v516, %v537
        %vm667 = vcmp.eq.s32.totalorder %v516, %v541
        %vm668 = vcmp.eq.s32.totalorder %v516, %v545
        %vm669 = vcmp.eq.s32.totalorder %v516, %v549
        %vm670 = vcmp.eq.s32.totalorder %v517, %v521
        %vm671 = vcmp.eq.s32.totalorder %v517, %v525
        %vm672 = vcmp.eq.s32.totalorder %v517, %v529
        %vm673 = vcmp.eq.s32.totalorder %v517, %v533
        %vm674 = vcmp.eq.s32.totalorder %v517, %v537
        %vm675 = vcmp.eq.s32.totalorder %v517, %v541
        %vm676 = vcmp.eq.s32.totalorder %v517, %v545
        %vm677 = vcmp.eq.s32.totalorder %v517, %v549
        %v678 = vsel %vm550, 1, 0
        %v679 = vsel %vm551, 1, 0
        %v680 = vsel %vm552, 1, 0
        %v681 = vsel %vm553, 1, 0
        %v682 = vsel %vm554, 1, 0
        %v683 = vsel %vm555, 1, 0
        %v684 = vsel %vm556, 1, 0
        %v685 = vsel %vm557, 1, 0
        %v686 = vsel %vm558, 1, 0
        %v687 = vsel %vm559, 1, 0
        %v688 = vsel %vm560, 1, 0
        %v689 = vsel %vm561, 1, 0
        %v690 = vsel %vm562, 1, 0
        %v691 = vsel %vm563, 1, 0
        %v692 = vsel %vm564, 1, 0
        %v693 = vsel %vm565, 1, 0
        %v694 = vsel %vm566, 1, 0
        %v695 = vsel %vm567, 1, 0
        %v696 = vsel %vm568, 1, 0
        %v697 = vsel %vm569, 1, 0
        %v698 = vsel %vm570, 1, 0
        %v699 = vsel %vm571, 1, 0
        %v700 = vsel %vm572, 1, 0
        %v701 = vsel %vm573, 1, 0
        %v702 = vsel %vm574, 1, 0
        %v703 = vsel %vm575, 1, 0
        %v704 = vsel %vm576, 1, 0
        %v705 = vsel %vm577, 1, 0
        %v706 = vsel %vm578, 1, 0
        %v707 = vsel %vm579, 1, 0
        %v708 = vsel %vm580, 1, 0
        %v709 = vsel %vm581, 1, 0
        %v710 = vsel %vm582, 1, 0
        %v711 = vsel %vm583, 1, 0
        %v712 = vsel %vm584, 1, 0
        %v713 = vsel %vm585, 1, 0
        %v714 = vsel %vm586, 1, 0
        %v715 = vsel %vm587, 1, 0
        %v716 = vsel %vm588, 1, 0
        %v717 = vsel %vm589, 1, 0
        %v718 = vsel %vm590, 1, 0
        %v719 = vsel %vm591, 1, 0
        %v720 = vsel %vm592, 1, 0
        %v721 = vsel %vm593, 1, 0
        %v722 = vsel %vm594, 1, 0
        %v723 = vsel %vm595, 1, 0
        %v724 = vsel %vm596, 1, 0
        %v725 = vsel %vm597, 1, 0
        %v726 = vsel %vm598, 1, 0
        %v727 = vsel %vm599, 1, 0
        %v728 = vsel %vm600, 1, 0
        %v729 = vsel %vm601, 1, 0
        %v730 = vsel %vm602, 1, 0
        %v731 = vsel %vm603, 1, 0
        %v732 = vsel %vm604, 1, 0
        %v733 = vsel %vm605, 1, 0
        %v734 = vsel %vm606, 1, 0
        %v735 = vsel %vm607, 1, 0
        %v736 = vsel %vm608, 1, 0
        %v737 = vsel %vm609, 1, 0
        %v738 = vsel %vm610, 1, 0
        %v739 = vsel %vm611, 1, 0
        %v740 = vsel %vm612, 1, 0
        %v741 = vsel %vm613, 1, 0
        %v742 = vsel %vm614, 1, 0
        %v743 = vsel %vm615, 1, 0
        %v744 = vsel %vm616, 1, 0
        %v745 = vsel %vm617, 1, 0
        %v746 = vsel %vm618, 1, 0
        %v747 = vsel %vm619, 1, 0
        %v748 = vsel %vm620, 1, 0
        %v749 = vsel %vm621, 1, 0
        %v750 = vsel %vm622, 1, 0
        %v751 = vsel %vm623, 1, 0
        %v752 = vsel %vm624, 1, 0
        %v753 = vsel %vm625, 1, 0
        %v754 = vsel %vm626, 1, 0
        %v755 = vsel %vm627, 1, 0
        %v756 = vsel %vm628, 1, 0
        %v757 = vsel %vm629, 1, 0
        %v758 = vsel %vm630, 1, 0
        %v759 = vsel %vm631, 1, 0
        %v760 = vsel %vm632, 1, 0
        %v761 = vsel %vm633, 1, 0
        %v762 = vsel %vm634, 1, 0
        %v763 = vsel %vm635, 1, 0
        %v764 = vsel %vm636, 1, 0
        %v765 = vsel %vm637, 1, 0
        %v766 = vsel %vm638, 1, 0
        %v767 = vsel %vm639, 1, 0
        %v768 = vsel %vm640, 1, 0
        %v769 = vsel %vm641, 1, 0
        %v770 = vsel %vm642, 1, 0
        %v771 = vsel %vm643, 1, 0
        %v772 = vsel %vm644, 1, 0
        %v773 = vsel %vm645, 1, 0
        %v774 = vsel %vm646, 1, 0
        %v775 = vsel %vm647, 1, 0
        %v776 = vsel %vm648, 1, 0
        %v777 = vsel %vm649, 1, 0
        %v778 = vsel %vm650, 1, 0
        %v779 = vsel %vm651, 1, 0
        %v780 = vsel %vm652, 1, 0
        %v781 = vsel %vm653, 1, 0
        %v782 = vsel %vm654, 1, 0
        %v783 = vsel %vm655, 1, 0
        %v784 = vsel %vm656, 1, 0
        %v785 = vsel %vm657, 1, 0
        %v786 = vsel %vm658, 1, 0
        %v787 = vsel %vm659, 1, 0
        %v788 = vsel %vm660, 1, 0
        %v789 = vsel %vm661, 1, 0
        %v790 = vsel %vm662, 1, 0
        %v791 = vsel %vm663, 1, 0
        %v792 = vsel %vm664, 1, 0
        %v793 = vsel %vm665, 1, 0
        %v794 = vsel %vm666, 1, 0
        %v795 = vsel %vm667, 1, 0
        %v796 = vsel %vm668, 1, 0
        %v797 = vsel %vm669, 1, 0
        %v798 = vsel %vm670, 1, 0
        %v799 = vsel %vm671, 1, 0
        %v800 = vsel %vm672, 1, 0
        %v801 = vsel %vm673, 1, 0
        %v802 = vsel %vm674, 1, 0
        %v803 = vsel %vm675, 1, 0
        %v804 = vsel %vm676, 1, 0
        %v805 = vsel %vm677, 1, 0
        %v806 = vcvt.s32.f32 %v678
        %v807 = vcvt.s32.f32 %v679
        %v808 = vcvt.s32.f32 %v680
        %v809 = vcvt.s32.f32 %v681
        %v810 = vcvt.s32.f32 %v682
        %v811 = vcvt.s32.f32 %v683
        %v812 = vcvt.s32.f32 %v684
        %v813 = vcvt.s32.f32 %v685
        %v814 = vcvt.s32.f32 %v686
        %v815 = vcvt.s32.f32 %v687
        %v816 = vcvt.s32.f32 %v688
        %v817 = vcvt.s32.f32 %v689
        %v818 = vcvt.s32.f32 %v690
        %v819 = vcvt.s32.f32 %v691
        %v820 = vcvt.s32.f32 %v692
        %v821 = vcvt.s32.f32 %v693
        %v822 = vcvt.s32.f32 %v694
        %v823 = vcvt.s32.f32 %v695
        %v824 = vcvt.s32.f32 %v696
        %v825 = vcvt.s32.f32 %v697
        %v826 = vcvt.s32.f32 %v698
        %v827 = vcvt.s32.f32 %v699
        %v828 = vcvt.s32.f32 %v700
        %v829 = vcvt.s32.f32 %v701
        %v830 = vcvt.s32.f32 %v702
        %v831 = vcvt.s32.f32 %v703
        %v832 = vcvt.s32.f32 %v704
        %v833 = vcvt.s32.f32 %v705
        %v834 = vcvt.s32.f32 %v706
        %v835 = vcvt.s32.f32 %v707
        %v836 = vcvt.s32.f32 %v708
        %v837 = vcvt.s32.f32 %v709
        %v838 = vcvt.s32.f32 %v710
        %v839 = vcvt.s32.f32 %v711
        %v840 = vcvt.s32.f32 %v712
        %v841 = vcvt.s32.f32 %v713
        %v842 = vcvt.s32.f32 %v714
        %v843 = vcvt.s32.f32 %v715
        %v844 = vcvt.s32.f32 %v716
        %v845 = vcvt.s32.f32 %v717
        %v846 = vcvt.s32.f32 %v718
        %v847 = vcvt.s32.f32 %v719
        %v848 = vcvt.s32.f32 %v720
        %v849 = vcvt.s32.f32 %v721
        %v850 = vcvt.s32.f32 %v722
        %v851 = vcvt.s32.f32 %v723
        %v852 = vcvt.s32.f32 %v724
        %v853 = vcvt.s32.f32 %v725
        %v854 = vcvt.s32.f32 %v726
        %v855 = vcvt.s32.f32 %v727
        %v856 = vcvt.s32.f32 %v728
        %v857 = vcvt.s32.f32 %v729
        %v858 = vcvt.s32.f32 %v730
        %v859 = vcvt.s32.f32 %v731
        %v860 = vcvt.s32.f32 %v732
        %v861 = vcvt.s32.f32 %v733
        %v862 = vcvt.s32.f32 %v734
        %v863 = vcvt.s32.f32 %v735
        %v864 = vcvt.s32.f32 %v736
        %v865 = vcvt.s32.f32 %v737
        %v866 = vcvt.s32.f32 %v738
        %v867 = vcvt.s32.f32 %v739
        %v868 = vcvt.s32.f32 %v740
        %v869 = vcvt.s32.f32 %v741
        %v870 = vcvt.s32.f32 %v742
        %v871 = vcvt.s32.f32 %v743
        %v872 = vcvt.s32.f32 %v744
        %v873 = vcvt.s32.f32 %v745
        %v874 = vcvt.s32.f32 %v746
        %v875 = vcvt.s32.f32 %v747
        %v876 = vcvt.s32.f32 %v748
        %v877 = vcvt.s32.f32 %v749
        %v878 = vcvt.s32.f32 %v750
        %v879 = vcvt.s32.f32 %v751
        %v880 = vcvt.s32.f32 %v752
        %v881 = vcvt.s32.f32 %v753
        %v882 = vcvt.s32.f32 %v754
        %v883 = vcvt.s32.f32 %v755
        %v884 = vcvt.s32.f32 %v756
        %v885 = vcvt.s32.f32 %v757
        %v886 = vcvt.s32.f32 %v758
        %v887 = vcvt.s32.f32 %v759
        %v888 = vcvt.s32.f32 %v760
        %v889 = vcvt.s32.f32 %v761
        %v890 = vcvt.s32.f32 %v762
        %v891 = vcvt.s32.f32 %v763
        %v892 = vcvt.s32.f32 %v764
        %v893 = vcvt.s32.f32 %v765
        %v894 = vcvt.s32.f32 %v766
        %v895 = vcvt.s32.f32 %v767
        %v896 = vcvt.s32.f32 %v768
        %v897 = vcvt.s32.f32 %v769
        %v898 = vcvt.s32.f32 %v770
        %v899 = vcvt.s32.f32 %v771
        %v900 = vcvt.s32.f32 %v772
        %v901 = vcvt.s32.f32 %v773
        %v902 = vcvt.s32.f32 %v774
        %v903 = vcvt.s32.f32 %v775
        %v904 = vcvt.s32.f32 %v776
        %v905 = vcvt.s32.f32 %v777
        %v906 = vcvt.s32.f32 %v778
        %v907 = vcvt.s32.f32 %v779
        %v908 = vcvt.s32.f32 %v780
        %v909 = vcvt.s32.f32 %v781
        %v910 = vcvt.s32.f32 %v782
        %v911 = vcvt.s32.f32 %v783
        %v912 = vcvt.s32.f32 %v784
        %v913 = vcvt.s32.f32 %v785
        %v914 = vcvt.s32.f32 %v786
        %v915 = vcvt.s32.f32 %v787
        %v916 = vcvt.s32.f32 %v788
        %v917 = vcvt.s32.f32 %v789
        %v918 = vcvt.s32.f32 %v790
        %v919 = vcvt.s32.f32 %v791
        %v920 = vcvt.s32.f32 %v792
        %v921 = vcvt.s32.f32 %v793
        %v922 = vcvt.s32.f32 %v794
        %v923 = vcvt.s32.f32 %v795
        %v924 = vcvt.s32.f32 %v796
        %v925 = vcvt.s32.f32 %v797
        %v926 = vcvt.s32.f32 %v798
        %v927 = vcvt.s32.f32 %v799
        %v928 = vcvt.s32.f32 %v800
        %v929 = vcvt.s32.f32 %v801
        %v930 = vcvt.s32.f32 %v802
        %v931 = vcvt.s32.f32 %v803
        %v932 = vcvt.s32.f32 %v804
        %v933 = vcvt.s32.f32 %v805
        %v934 = vpack.c.bf16 %v814, %v806
        %v935 = vpack.c.bf16 %v815, %v807
        %v936 = vpack.c.bf16 %v816, %v808
        %v937 = vpack.c.bf16 %v817, %v809
        %v938 = vpack.c.bf16 %v818, %v810
        %v939 = vpack.c.bf16 %v819, %v811
        %v940 = vpack.c.bf16 %v820, %v812
        %v941 = vpack.c.bf16 %v821, %v813
        %v942 = vpack.c.bf16 %v830, %v822
        %v943 = vpack.c.bf16 %v831, %v823
        %v944 = vpack.c.bf16 %v832, %v824
        %v945 = vpack.c.bf16 %v833, %v825
        %v946 = vpack.c.bf16 %v834, %v826
        %v947 = vpack.c.bf16 %v835, %v827
        %v948 = vpack.c.bf16 %v836, %v828
        %v949 = vpack.c.bf16 %v837, %v829
        %v950 = vpack.c.bf16 %v846, %v838
        %v951 = vpack.c.bf16 %v847, %v839
        %v952 = vpack.c.bf16 %v848, %v840
        %v953 = vpack.c.bf16 %v849, %v841
        %v954 = vpack.c.bf16 %v850, %v842
        %v955 = vpack.c.bf16 %v851, %v843
        %v956 = vpack.c.bf16 %v852, %v844
        %v957 = vpack.c.bf16 %v853, %v845
        %v958 = vpack.c.bf16 %v862, %v854
        %v959 = vpack.c.bf16 %v863, %v855
        %v960 = vpack.c.bf16 %v864, %v856
        %v961 = vpack.c.bf16 %v865, %v857
        %v962 = vpack.c.bf16 %v866, %v858
        %v963 = vpack.c.bf16 %v867, %v859
        %v964 = vpack.c.bf16 %v868, %v860
        %v965 = vpack.c.bf16 %v869, %v861
        %v966 = vpack.c.bf16 %v878, %v870
        %v967 = vpack.c.bf16 %v879, %v871
        %v968 = vpack.c.bf16 %v880, %v872
        %v969 = vpack.c.bf16 %v881, %v873
        %v970 = vpack.c.bf16 %v882, %v874
        %v971 = vpack.c.bf16 %v883, %v875
        %v972 = vpack.c.bf16 %v884, %v876
        %v973 = vpack.c.bf16 %v885, %v877
        %v974 = vpack.c.bf16 %v894, %v886
        %v975 = vpack.c.bf16 %v895, %v887
        %v976 = vpack.c.bf16 %v896, %v888
        %v977 = vpack.c.bf16 %v897, %v889
        %v978 = vpack.c.bf16 %v898, %v890
        %v979 = vpack.c.bf16 %v899, %v891
        %v980 = vpack.c.bf16 %v900, %v892
        %v981 = vpack.c.bf16 %v901, %v893
        %v982 = vpack.c.bf16 %v910, %v902
        %v983 = vpack.c.bf16 %v911, %v903
        %v984 = vpack.c.bf16 %v912, %v904
        %v985 = vpack.c.bf16 %v913, %v905
        %v986 = vpack.c.bf16 %v914, %v906
        %v987 = vpack.c.bf16 %v915, %v907
        %v988 = vpack.c.bf16 %v916, %v908
        %v989 = vpack.c.bf16 %v917, %v909
        %v990 = vpack.c.bf16 %v926, %v918
        %v991 = vpack.c.bf16 %v927, %v919
        %v992 = vpack.c.bf16 %v928, %v920
        %v993 = vpack.c.bf16 %v929, %v921
        %v994 = vpack.c.bf16 %v930, %v922
        %v995 = vpack.c.bf16 %v931, %v923
        %v996 = vpack.c.bf16 %v932, %v924
        %v997 = vpack.c.bf16 %v933, %v925
        %998 = vmatprep.subr.bf16.mxu0 %v935
        %999 = vmatpush1.bf16.msra.mxu0 %v934
        %1000 = vmatprep.subr.bf16.mxu0 %v943
        %1001 = vmatpush1.bf16.msra.mxu0 %v942
        %1002 = vmatprep.subr.bf16.mxu0 %v951
        %1003 = vmatpush1.bf16.msra.mxu0 %v950
        %1004 = vmatprep.subr.bf16.mxu0 %v959
        %1005 = vmatpush1.bf16.msra.mxu0 %v958
        %1006 = vmatprep.subr.bf16.mxu0 %v967
        %1007 = vmatpush1.bf16.msra.mxu0 %v966
        %1008 = vmatprep.subr.bf16.mxu0 %v975
        %1009 = vmatpush1.bf16.msra.mxu0 %v974
        %1010 = vmatprep.subr.bf16.mxu0 %v983
        %1011 = vmatpush1.bf16.msra.mxu0 %v982
        %1012 = vmatprep.subr.bf16.mxu0 %v991
        %1013 = vmatpush1.bf16.msra.mxu0 %v990
        %1014 = vmatprep.subr.bf16.mxu0 0
        %1015 = vmatpush1.bf16.msra.mxu0 0
        %1016 = vmatprep.subr.bf16.mxu0 0
        %1017 = vmatpush1.bf16.msra.mxu0 0
        %1018 = vmatprep.subr.bf16.mxu0 0
        %1019 = vmatpush1.bf16.msra.mxu0 0
        %1020 = vmatprep.subr.bf16.mxu0 0
        %1021 = vmatpush1.bf16.msra.mxu0 0
        %1022 = vmatprep.subr.bf16.mxu0 0
        %1023 = vmatpush1.bf16.msra.mxu0 0
        %1024 = vmatprep.subr.bf16.mxu0 0
        %1025 = vmatpush1.bf16.msra.mxu0 0
        %1026 = vmatprep.subr.bf16.mxu0 0
        %1027 = vmatpush1.bf16.msra.mxu0 0
        %1028 = vmatprep.subr.bf16.mxu0 0
        %1029 = vmatpush1.bf16.msra.mxu0 0
        %1030 = vmatprep.mubr.bf16.mxu0 0
        %1031 = vmatmul.mubr.bf16.gmra.mrb[0].mxu0 %v352
        %v1032 = vpop.f32.mrb[0].mxu0
        %v1033 = vadd.f32 0.0, %v1032
        %v1034 = vpop.f32.mrb[0].mxu0
        %v1035 = vadd.f32 0.0, %v1034
        %v1036 = vpop.f32.mrb[0].mxu0
        %v1037 = vpop.f32.mrb[0].mxu0
        %1038 = vdwg.mxu0
        %1039 = vmatprep.subr.bf16.mxu0 %v937
        %1040 = vmatpush1.bf16.msra.mxu0 %v936
        %1041 = vmatprep.subr.bf16.mxu0 %v945
        %1042 = vmatpush1.bf16.msra.mxu0 %v944
        %1043 = vmatprep.subr.bf16.mxu0 %v953
        %1044 = vmatpush1.bf16.msra.mxu0 %v952
        %1045 = vmatprep.subr.bf16.mxu0 %v961
        %1046 = vmatpush1.bf16.msra.mxu0 %v960
        %1047 = vmatprep.subr.bf16.mxu0 %v969
        %1048 = vmatpush1.bf16.msra.mxu0 %v968
        %1049 = vmatprep.subr.bf16.mxu0 %v977
        %1050 = vmatpush1.bf16.msra.mxu0 %v976
        %1051 = vmatprep.subr.bf16.mxu0 %v985
        %1052 = vmatpush1.bf16.msra.mxu0 %v984
        %1053 = vmatprep.subr.bf16.mxu0 %v993
        %1054 = vmatpush1.bf16.msra.mxu0 %v992
        %1055 = vmatprep.subr.bf16.mxu0 0
        %1056 = vmatpush1.bf16.msra.mxu0 0
        %1057 = vmatprep.subr.bf16.mxu0 0
        %1058 = vmatpush1.bf16.msra.mxu0 0
        %1059 = vmatprep.subr.bf16.mxu0 0
        %1060 = vmatpush1.bf16.msra.mxu0 0
        %1061 = vmatprep.subr.bf16.mxu0 0
        %1062 = vmatpush1.bf16.msra.mxu0 0
        %1063 = vmatprep.subr.bf16.mxu0 0
        %1064 = vmatpush1.bf16.msra.mxu0 0
        %1065 = vmatprep.subr.bf16.mxu0 0
        %1066 = vmatpush1.bf16.msra.mxu0 0
        %1067 = vmatprep.subr.bf16.mxu0 0
        %1068 = vmatpush1.bf16.msra.mxu0 0
        %1069 = vmatprep.subr.bf16.mxu0 0
        %1070 = vmatpush1.bf16.msra.mxu0 0
        %1071 = vmatprep.mubr.bf16.mxu0 0
        %1072 = vmatmul.mubr.bf16.gmra.mrb[0].mxu0 %v352
        %v1073 = vpop.f32.mrb[0].mxu0
        %v1074 = vadd.f32 0.0, %v1073
        %v1075 = vpop.f32.mrb[0].mxu0
        %v1076 = vadd.f32 0.0, %v1075
        %v1077 = vpop.f32.mrb[0].mxu0
        %v1078 = vpop.f32.mrb[0].mxu0
        %1079 = vdwg.mxu0
        %1080 = vmatprep.subr.bf16.mxu0 %v939
        %1081 = vmatpush1.bf16.msra.mxu0 %v938
        %1082 = vmatprep.subr.bf16.mxu0 %v947
        %1083 = vmatpush1.bf16.msra.mxu0 %v946
        %1084 = vmatprep.subr.bf16.mxu0 %v955
        %1085 = vmatpush1.bf16.msra.mxu0 %v954
        %1086 = vmatprep.subr.bf16.mxu0 %v963
        %1087 = vmatpush1.bf16.msra.mxu0 %v962
        %1088 = vmatprep.subr.bf16.mxu0 %v971
        %1089 = vmatpush1.bf16.msra.mxu0 %v970
        %1090 = vmatprep.subr.bf16.mxu0 %v979
        %1091 = vmatpush1.bf16.msra.mxu0 %v978
        %1092 = vmatprep.subr.bf16.mxu0 %v987
        %1093 = vmatpush1.bf16.msra.mxu0 %v986
        %1094 = vmatprep.subr.bf16.mxu0 %v995
        %1095 = vmatpush1.bf16.msra.mxu0 %v994
        %1096 = vmatprep.subr.bf16.mxu0 0
        %1097 = vmatpush1.bf16.msra.mxu0 0
        %1098 = vmatprep.subr.bf16.mxu0 0
        %1099 = vmatpush1.bf16.msra.mxu0 0
        %1100 = vmatprep.subr.bf16.mxu0 0
        %1101 = vmatpush1.bf16.msra.mxu0 0
        %1102 = vmatprep.subr.bf16.mxu0 0
        %1103 = vmatpush1.bf16.msra.mxu0 0
        %1104 = vmatprep.subr.bf16.mxu0 0
        %1105 = vmatpush1.bf16.msra.mxu0 0
        %1106 = vmatprep.subr.bf16.mxu0 0
        %1107 = vmatpush1.bf16.msra.mxu0 0
        %1108 = vmatprep.subr.bf16.mxu0 0
        %1109 = vmatpush1.bf16.msra.mxu0 0
        %1110 = vmatprep.subr.bf16.mxu0 0
        %1111 = vmatpush1.bf16.msra.mxu0 0
        %1112 = vmatprep.mubr.bf16.mxu0 0
        %1113 = vmatmul.mubr.bf16.gmra.mrb[0].mxu0 %v352
        %v1114 = vpop.f32.mrb[0].mxu0
        %v1115 = vadd.f32 0.0, %v1114
        %v1116 = vpop.f32.mrb[0].mxu0
        %v1117 = vadd.f32 0.0, %v1116
        %v1118 = vpop.f32.mrb[0].mxu0
        %v1119 = vpop.f32.mrb[0].mxu0
        %1120 = vdwg.mxu0
        %1121 = vmatprep.subr.bf16.mxu0 %v941
        %1122 = vmatpush1.bf16.msra.mxu0 %v940
        %1123 = vmatprep.subr.bf16.mxu0 %v949
        %1124 = vmatpush1.bf16.msra.mxu0 %v948
        %1125 = vmatprep.subr.bf16.mxu0 %v957
        %1126 = vmatpush1.bf16.msra.mxu0 %v956
        %1127 = vmatprep.subr.bf16.mxu0 %v965
        %1128 = vmatpush1.bf16.msra.mxu0 %v964
        %1129 = vmatprep.subr.bf16.mxu0 %v973
        %1130 = vmatpush1.bf16.msra.mxu0 %v972
        %1131 = vmatprep.subr.bf16.mxu0 %v981
        %1132 = vmatpush1.bf16.msra.mxu0 %v980
        %1133 = vmatprep.subr.bf16.mxu0 %v989
        %1134 = vmatpush1.bf16.msra.mxu0 %v988
        %1135 = vmatprep.subr.bf16.mxu0 %v997
        %1136 = vmatpush1.bf16.msra.mxu0 %v996
        %1137 = vmatprep.subr.bf16.mxu0 0
        %1138 = vmatpush1.bf16.msra.mxu0 0
        %1139 = vmatprep.subr.bf16.mxu0 0
        %1140 = vmatpush1.bf16.msra.mxu0 0
        %1141 = vmatprep.subr.bf16.mxu0 0
        %1142 = vmatpush1.bf16.msra.mxu0 0
        %1143 = vmatprep.subr.bf16.mxu0 0
        %1144 = vmatpush1.bf16.msra.mxu0 0
        %1145 = vmatprep.subr.bf16.mxu0 0
        %1146 = vmatpush1.bf16.msra.mxu0 0
        %1147 = vmatprep.subr.bf16.mxu0 0
        %1148 = vmatpush1.bf16.msra.mxu0 0
        %1149 = vmatprep.subr.bf16.mxu0 0
        %1150 = vmatpush1.bf16.msra.mxu0 0
        %1151 = vmatprep.subr.bf16.mxu0 0
        %1152 = vmatpush1.bf16.msra.mxu0 0
        %1153 = vmatprep.mubr.bf16.mxu0 0
        %1154 = vmatmul.mubr.bf16.gmra.mrb[0].mxu0 %v352
        %v1155 = vpop.f32.mrb[0].mxu0
        %v1156 = vadd.f32 0.0, %v1155
        %v1157 = vpop.f32.mrb[0].mxu0
        %v1158 = vadd.f32 0.0, %v1157
        %v1159 = vpop.f32.mrb[0].mxu0
        %v1160 = vpop.f32.mrb[0].mxu0
        %1161 = vdwg.mxu0
        %v1162 = vld [vmem:[%s5] sm:$0xf]
        %v1163 = vld [vmem:[%s5 + $0x4] sm:$0xf]
        %v1164 = vld [vmem:[%s5 + $0x8] sm:$0xf]
        %v1165 = vld [vmem:[%s5 + $0xc] sm:$0xf]
        %v1166 = vld [vmem:[%s5 + $0x10] sm:$0xf]
        %v1167 = vld [vmem:[%s5 + $0x14] sm:$0xf]
        %v1168 = vld [vmem:[%s5 + $0x18] sm:$0xf]
        %v1169 = vld [vmem:[%s5 + $0x1c] sm:$0xf]
        %v1170 = vld [vmem:[%s5 + $0x20] sm:$0xf]
        %v1171 = vld [vmem:[%s5 + $0x24] sm:$0xf]
        %v1172 = vld [vmem:[%s5 + $0x28] sm:$0xf]
        %v1173 = vld [vmem:[%s5 + $0x2c] sm:$0xf]
        %v1174 = vpack.c.bf16 %v1033, %v1033
        %v1175 = vpack.c.bf16 %v1035, %v1035
        %v1176 = vpack.c.bf16 %v1074, %v1074
        %v1177 = vpack.c.bf16 %v1076, %v1076
        %v1178 = vpack.c.bf16 %v1115, %v1115
        %v1179 = vpack.c.bf16 %v1117, %v1117
        %v1180 = vpack.c.bf16 %v1156, %v1156
        %v1181 = vpack.c.bf16 %v1158, %v1158
        %v1194 = vunpack.c.l.b16 %v1162
        %v1195 = vunpack.c.l.b16 %v1163
        %v1196 = vunpack.c.l.b16 %v1164
        %v1197 = vunpack.c.l.b16 %v1165
        %v1198 = vunpack.c.l.b16 %v1166
        %v1199 = vunpack.c.l.b16 %v1167
        %v1200 = vunpack.c.l.b16 %v1168
        %v1201 = vunpack.c.l.b16 %v1169
        %v1202 = vunpack.c.l.b16 %v1170
        %v1203 = vunpack.c.l.b16 %v1171
        %v1204 = vunpack.c.l.b16 %v1172
        %v1205 = vunpack.c.l.b16 %v1173
        %v1206 = vpack.c.b16 %v1195, %v1194
        %v1207 = vpack.c.b16 %v1197, %v1196
        %v1208 = vpack.c.b16 %v1199, %v1198
        %v1209 = vpack.c.b16 %v1201, %v1200
        %v1210 = vpack.c.b16 %v1203, %v1202
        %v1211 = vpack.c.b16 %v1205, %v1204
        %v1213 = vsel %vm396, %v1206, 0
        %v1216 = vsel %vm396, %v1207, 0
        %v1219 = vsel %vm396, %v1208, 0
        %v1222 = vsel %vm396, %v1209, 0
        %v1225 = vsel %vm396, %v1210, 0
        %v1228 = vsel %vm396, %v1211, 0
        %v1231 = vsel %vm415, %v1174, 0
        %v1234 = vsel %vm415, %v1175, 0
        %v1237 = vsel %vm415, %v1176, 0
        %v1240 = vsel %vm415, %v1177, 0
        %v1243 = vsel %vm415, %v1178, 0
        %v1246 = vsel %vm415, %v1179, 0
        %v1249 = vsel %vm415, %v1180, 0
        %v1252 = vsel %vm415, %v1181, 0
        %1254 = vmatprep.subr.bf16.mxu0 %v1234
        %1255 = vmatpush1.bf16.msra.mxu0 %v1231
        %1256 = vmatprep.subr.bf16.mxu0 0
        %1257 = vmatpush1.bf16.msra.mxu0 0
        %1258 = vmatprep.subr.bf16.mxu0 0
        %1259 = vmatpush1.bf16.msra.mxu0 0
        %1260 = vmatprep.subr.bf16.mxu0 0
        %1261 = vmatpush1.bf16.msra.mxu0 0
        %1262 = vmatprep.subr.bf16.mxu0 0
        %1263 = vmatpush1.bf16.msra.mxu0 0
        %1264 = vmatprep.subr.bf16.mxu0 0
        %1265 = vmatpush1.bf16.msra.mxu0 0
        %1266 = vmatprep.subr.bf16.mxu0 0
        %1267 = vmatpush1.bf16.msra.mxu0 0
        %1268 = vmatprep.subr.bf16.mxu0 0
        %1269 = vmatpush1.bf16.msra.mxu0 0
        %1270 = vmatprep.subr.bf16.mxu0 0
        %1271 = vmatpush1.bf16.msra.mxu0 0
        %1272 = vmatprep.subr.bf16.mxu0 0
        %1273 = vmatpush1.bf16.msra.mxu0 0
        %1274 = vmatprep.subr.bf16.mxu0 0
        %1275 = vmatpush1.bf16.msra.mxu0 0
        %1276 = vmatprep.subr.bf16.mxu0 0
        %1277 = vmatpush1.bf16.msra.mxu0 0
        %1278 = vmatprep.subr.bf16.mxu0 0
        %1279 = vmatpush1.bf16.msra.mxu0 0
        %1280 = vmatprep.subr.bf16.mxu0 0
        %1281 = vmatpush1.bf16.msra.mxu0 0
        %1282 = vmatprep.subr.bf16.mxu0 0
        %1283 = vmatpush1.bf16.msra.mxu0 0
        %1284 = vmatprep.subr.bf16.mxu0 0
        %1285 = vmatpush1.bf16.msra.mxu0 0
        %1286 = vmatprep.mubr.bf16.mxu0 0
        %1287 = vmatmul.mubr.bf16.gmra.mrb[0].mxu0 %v1213
        %v1288 = vpop.f32.mrb[0].mxu0
        %v1289 = vadd.f32 0.0, %v1288
        %v1290 = vpop.f32.mrb[0].mxu0
        %v1291 = vadd.f32 0.0, %v1290
        %v1292 = vpop.f32.mrb[0].mxu0
        %v1293 = vadd.f32 0.0, %v1292
        %v1294 = vpop.f32.mrb[0].mxu0
        %v1295 = vadd.f32 0.0, %v1294
        %1296 = vmatprep.mubr.bf16.mxu0 0
        %1297 = vmatmul.mubr.bf16.gmra.mrb[0].mxu0 %v1216
        %v1298 = vpop.f32.mrb[0].mxu0
        %v1299 = vadd.f32 0.0, %v1298
        %v1300 = vpop.f32.mrb[0].mxu0
        %v1301 = vadd.f32 0.0, %v1300
        %v1302 = vpop.f32.mrb[0].mxu0
        %v1303 = vadd.f32 0.0, %v1302
        %v1304 = vpop.f32.mrb[0].mxu0
        %v1305 = vadd.f32 0.0, %v1304
        %1306 = vmatprep.mubr.bf16.mxu0 0
        %1307 = vmatmul.mubr.bf16.gmra.mrb[0].mxu0 %v1219
        %v1308 = vpop.f32.mrb[0].mxu0
        %v1309 = vadd.f32 0.0, %v1308
        %v1310 = vpop.f32.mrb[0].mxu0
        %v1311 = vadd.f32 0.0, %v1310
        %v1312 = vpop.f32.mrb[0].mxu0
        %v1313 = vadd.f32 0.0, %v1312
        %v1314 = vpop.f32.mrb[0].mxu0
        %v1315 = vadd.f32 0.0, %v1314
        %1316 = vmatprep.mubr.bf16.mxu0 0
        %1317 = vmatmul.mubr.bf16.gmra.mrb[0].mxu0 %v1222
        %v1318 = vpop.f32.mrb[0].mxu0
        %v1319 = vadd.f32 0.0, %v1318
        %v1320 = vpop.f32.mrb[0].mxu0
        %v1321 = vadd.f32 0.0, %v1320
        %v1322 = vpop.f32.mrb[0].mxu0
        %v1323 = vadd.f32 0.0, %v1322
        %v1324 = vpop.f32.mrb[0].mxu0
        %v1325 = vadd.f32 0.0, %v1324
        %1326 = vmatprep.mubr.bf16.mxu0 0
        %1327 = vmatmul.mubr.bf16.gmra.mrb[0].mxu0 %v1225
        %v1328 = vpop.f32.mrb[0].mxu0
        %v1329 = vadd.f32 0.0, %v1328
        %v1330 = vpop.f32.mrb[0].mxu0
        %v1331 = vadd.f32 0.0, %v1330
        %v1332 = vpop.f32.mrb[0].mxu0
        %v1333 = vadd.f32 0.0, %v1332
        %v1334 = vpop.f32.mrb[0].mxu0
        %v1335 = vadd.f32 0.0, %v1334
        %1336 = vmatprep.mubr.bf16.mxu0 0
        %1337 = vmatmul.mubr.bf16.gmra.mrb[0].mxu0 %v1228
        %v1338 = vpop.f32.mrb[0].mxu0
        %v1339 = vadd.f32 0.0, %v1338
        %v1340 = vpop.f32.mrb[0].mxu0
        %v1341 = vadd.f32 0.0, %v1340
        %v1342 = vpop.f32.mrb[0].mxu0
        %v1343 = vadd.f32 0.0, %v1342
        %v1344 = vpop.f32.mrb[0].mxu0
        %v1345 = vadd.f32 0.0, %v1344
        %1346 = vdwg.mxu0
        %1347 = vmatprep.subr.bf16.mxu0 %v1240
        %1348 = vmatpush1.bf16.msra.mxu0 %v1237
        %1349 = vmatprep.subr.bf16.mxu0 0
        %1350 = vmatpush1.bf16.msra.mxu0 0
        %1351 = vmatprep.subr.bf16.mxu0 0
        %1352 = vmatpush1.bf16.msra.mxu0 0
        %1353 = vmatprep.subr.bf16.mxu0 0
        %1354 = vmatpush1.bf16.msra.mxu0 0
        %1355 = vmatprep.subr.bf16.mxu0 0
        %1356 = vmatpush1.bf16.msra.mxu0 0
        %1357 = vmatprep.subr.bf16.mxu0 0
        %1358 = vmatpush1.bf16.msra.mxu0 0
        %1359 = vmatprep.subr.bf16.mxu0 0
        %1360 = vmatpush1.bf16.msra.mxu0 0
        %1361 = vmatprep.subr.bf16.mxu0 0
        %1362 = vmatpush1.bf16.msra.mxu0 0
        %1363 = vmatprep.subr.bf16.mxu0 0
        %1364 = vmatpush1.bf16.msra.mxu0 0
        %1365 = vmatprep.subr.bf16.mxu0 0
        %1366 = vmatpush1.bf16.msra.mxu0 0
        %1367 = vmatprep.subr.bf16.mxu0 0
        %1368 = vmatpush1.bf16.msra.mxu0 0
        %1369 = vmatprep.subr.bf16.mxu0 0
        %1370 = vmatpush1.bf16.msra.mxu0 0
        %1371 = vmatprep.subr.bf16.mxu0 0
        %1372 = vmatpush1.bf16.msra.mxu0 0
        %1373 = vmatprep.subr.bf16.mxu0 0
        %1374 = vmatpush1.bf16.msra.mxu0 0
        %1375 = vmatprep.subr.bf16.mxu0 0
        %1376 = vmatpush1.bf16.msra.mxu0 0
        %1377 = vmatprep.subr.bf16.mxu0 0
        %1378 = vmatpush1.bf16.msra.mxu0 0
        %1379 = vmatprep.mubr.bf16.mxu0 0
        %1380 = vmatmul.mubr.bf16.gmra.mrb[0].mxu0 %v1213
        %v1381 = vpop.f32.mrb[0].mxu0
        %v1382 = vadd.f32 0.0, %v1381
        %v1383 = vpop.f32.mrb[0].mxu0
        %v1384 = vadd.f32 0.0, %v1383
        %v1385 = vpop.f32.mrb[0].mxu0
        %v1386 = vadd.f32 0.0, %v1385
        %v1387 = vpop.f32.mrb[0].mxu0
        %v1388 = vadd.f32 0.0, %v1387
        %1389 = vmatprep.mubr.bf16.mxu0 0
        %1390 = vmatmul.mubr.bf16.gmra.mrb[0].mxu0 %v1216
        %v1391 = vpop.f32.mrb[0].mxu0
        %v1392 = vadd.f32 0.0, %v1391
        %v1393 = vpop.f32.mrb[0].mxu0
        %v1394 = vadd.f32 0.0, %v1393
        %v1395 = vpop.f32.mrb[0].mxu0
        %v1396 = vadd.f32 0.0, %v1395
        %v1397 = vpop.f32.mrb[0].mxu0
        %v1398 = vadd.f32 0.0, %v1397
        %1399 = vmatprep.mubr.bf16.mxu0 0
        %1400 = vmatmul.mubr.bf16.gmra.mrb[0].mxu0 %v1219
        %v1401 = vpop.f32.mrb[0].mxu0
        %v1402 = vadd.f32 0.0, %v1401
        %v1403 = vpop.f32.mrb[0].mxu0
        %v1404 = vadd.f32 0.0, %v1403
        %v1405 = vpop.f32.mrb[0].mxu0
        %v1406 = vadd.f32 0.0, %v1405
        %v1407 = vpop.f32.mrb[0].mxu0
        %v1408 = vadd.f32 0.0, %v1407
        %1409 = vmatprep.mubr.bf16.mxu0 0
        %1410 = vmatmul.mubr.bf16.gmra.mrb[0].mxu0 %v1222
        %v1411 = vpop.f32.mrb[0].mxu0
        %v1412 = vadd.f32 0.0, %v1411
        %v1413 = vpop.f32.mrb[0].mxu0
        %v1414 = vadd.f32 0.0, %v1413
        %v1415 = vpop.f32.mrb[0].mxu0
        %v1416 = vadd.f32 0.0, %v1415
        %v1417 = vpop.f32.mrb[0].mxu0
        %v1418 = vadd.f32 0.0, %v1417
        %1419 = vmatprep.mubr.bf16.mxu0 0
        %1420 = vmatmul.mubr.bf16.gmra.mrb[0].mxu0 %v1225
        %v1421 = vpop.f32.mrb[0].mxu0
        %v1422 = vadd.f32 0.0, %v1421
        %v1423 = vpop.f32.mrb[0].mxu0
        %v1424 = vadd.f32 0.0, %v1423
        %v1425 = vpop.f32.mrb[0].mxu0
        %v1426 = vadd.f32 0.0, %v1425
        %v1427 = vpop.f32.mrb[0].mxu0
        %v1428 = vadd.f32 0.0, %v1427
        %1429 = vmatprep.mubr.bf16.mxu0 0
        %1430 = vmatmul.mubr.bf16.gmra.mrb[0].mxu0 %v1228
        %v1431 = vpop.f32.mrb[0].mxu0
        %v1432 = vadd.f32 0.0, %v1431
        %v1433 = vpop.f32.mrb[0].mxu0
        %v1434 = vadd.f32 0.0, %v1433
        %v1435 = vpop.f32.mrb[0].mxu0
        %v1436 = vadd.f32 0.0, %v1435
        %v1437 = vpop.f32.mrb[0].mxu0
        %v1438 = vadd.f32 0.0, %v1437
        %1439 = vdwg.mxu0
        %1440 = vmatprep.subr.bf16.mxu0 %v1246
        %1441 = vmatpush1.bf16.msra.mxu0 %v1243
        %1442 = vmatprep.subr.bf16.mxu0 0
        %1443 = vmatpush1.bf16.msra.mxu0 0
        %1444 = vmatprep.subr.bf16.mxu0 0
        %1445 = vmatpush1.bf16.msra.mxu0 0
        %1446 = vmatprep.subr.bf16.mxu0 0
        %1447 = vmatpush1.bf16.msra.mxu0 0
        %1448 = vmatprep.subr.bf16.mxu0 0
        %1449 = vmatpush1.bf16.msra.mxu0 0
        %1450 = vmatprep.subr.bf16.mxu0 0
        %1451 = vmatpush1.bf16.msra.mxu0 0
        %1452 = vmatprep.subr.bf16.mxu0 0
        %1453 = vmatpush1.bf16.msra.mxu0 0
        %1454 = vmatprep.subr.bf16.mxu0 0
        %1455 = vmatpush1.bf16.msra.mxu0 0
        %1456 = vmatprep.subr.bf16.mxu0 0
        %1457 = vmatpush1.bf16.msra.mxu0 0
        %1458 = vmatprep.subr.bf16.mxu0 0
        %1459 = vmatpush1.bf16.msra.mxu0 0
        %1460 = vmatprep.subr.bf16.mxu0 0
        %1461 = vmatpush1.bf16.msra.mxu0 0
        %1462 = vmatprep.subr.bf16.mxu0 0
        %1463 = vmatpush1.bf16.msra.mxu0 0
        %1464 = vmatprep.subr.bf16.mxu0 0
        %1465 = vmatpush1.bf16.msra.mxu0 0
        %1466 = vmatprep.subr.bf16.mxu0 0
        %1467 = vmatpush1.bf16.msra.mxu0 0
        %1468 = vmatprep.subr.bf16.mxu0 0
        %1469 = vmatpush1.bf16.msra.mxu0 0
        %1470 = vmatprep.subr.bf16.mxu0 0
        %1471 = vmatpush1.bf16.msra.mxu0 0
        %1472 = vmatprep.mubr.bf16.mxu0 0
        %1473 = vmatmul.mubr.bf16.gmra.mrb[0].mxu0 %v1213
        %v1474 = vpop.f32.mrb[0].mxu0
        %v1475 = vadd.f32 0.0, %v1474
        %v1476 = vpop.f32.mrb[0].mxu0
        %v1477 = vadd.f32 0.0, %v1476
        %v1478 = vpop.f32.mrb[0].mxu0
        %v1479 = vadd.f32 0.0, %v1478
        %v1480 = vpop.f32.mrb[0].mxu0
        %v1481 = vadd.f32 0.0, %v1480
        %1482 = vmatprep.mubr.bf16.mxu0 0
        %1483 = vmatmul.mubr.bf16.gmra.mrb[0].mxu0 %v1216
        %v1484 = vpop.f32.mrb[0].mxu0
        %v1485 = vadd.f32 0.0, %v1484
        %v1486 = vpop.f32.mrb[0].mxu0
        %v1487 = vadd.f32 0.0, %v1486
        %v1488 = vpop.f32.mrb[0].mxu0
        %v1489 = vadd.f32 0.0, %v1488
        %v1490 = vpop.f32.mrb[0].mxu0
        %v1491 = vadd.f32 0.0, %v1490
        %1492 = vmatprep.mubr.bf16.mxu0 0
        %1493 = vmatmul.mubr.bf16.gmra.mrb[0].mxu0 %v1219
        %v1494 = vpop.f32.mrb[0].mxu0
        %v1495 = vadd.f32 0.0, %v1494
        %v1496 = vpop.f32.mrb[0].mxu0
        %v1497 = vadd.f32 0.0, %v1496
        %v1498 = vpop.f32.mrb[0].mxu0
        %v1499 = vadd.f32 0.0, %v1498
        %v1500 = vpop.f32.mrb[0].mxu0
        %v1501 = vadd.f32 0.0, %v1500
        %1502 = vmatprep.mubr.bf16.mxu0 0
        %1503 = vmatmul.mubr.bf16.gmra.mrb[0].mxu0 %v1222
        %v1504 = vpop.f32.mrb[0].mxu0
        %v1505 = vadd.f32 0.0, %v1504
        %v1506 = vpop.f32.mrb[0].mxu0
        %v1507 = vadd.f32 0.0, %v1506
        %v1508 = vpop.f32.mrb[0].mxu0
        %v1509 = vadd.f32 0.0, %v1508
        %v1510 = vpop.f32.mrb[0].mxu0
        %v1511 = vadd.f32 0.0, %v1510
        %1512 = vmatprep.mubr.bf16.mxu0 0
        %1513 = vmatmul.mubr.bf16.gmra.mrb[0].mxu0 %v1225
        %v1514 = vpop.f32.mrb[0].mxu0
        %v1515 = vadd.f32 0.0, %v1514
        %v1516 = vpop.f32.mrb[0].mxu0
        %v1517 = vadd.f32 0.0, %v1516
        %v1518 = vpop.f32.mrb[0].mxu0
        %v1519 = vadd.f32 0.0, %v1518
        %v1520 = vpop.f32.mrb[0].mxu0
        %v1521 = vadd.f32 0.0, %v1520
        %1522 = vmatprep.mubr.bf16.mxu0 0
        %1523 = vmatmul.mubr.bf16.gmra.mrb[0].mxu0 %v1228
        %v1524 = vpop.f32.mrb[0].mxu0
        %v1525 = vadd.f32 0.0, %v1524
        %v1526 = vpop.f32.mrb[0].mxu0
        %v1527 = vadd.f32 0.0, %v1526
        %v1528 = vpop.f32.mrb[0].mxu0
        %v1529 = vadd.f32 0.0, %v1528
        %v1530 = vpop.f32.mrb[0].mxu0
        %v1531 = vadd.f32 0.0, %v1530
        %1532 = vdwg.mxu0
        %1533 = vmatprep.subr.bf16.mxu0 %v1252
        %1534 = vmatpush1.bf16.msra.mxu0 %v1249
        %1535 = vmatprep.subr.bf16.mxu0 0
        %1536 = vmatpush1.bf16.msra.mxu0 0
        %1537 = vmatprep.subr.bf16.mxu0 0
        %1538 = vmatpush1.bf16.msra.mxu0 0
        %1539 = vmatprep.subr.bf16.mxu0 0
        %1540 = vmatpush1.bf16.msra.mxu0 0
        %1541 = vmatprep.subr.bf16.mxu0 0
        %1542 = vmatpush1.bf16.msra.mxu0 0
        %1543 = vmatprep.subr.bf16.mxu0 0
        %1544 = vmatpush1.bf16.msra.mxu0 0
        %1545 = vmatprep.subr.bf16.mxu0 0
        %1546 = vmatpush1.bf16.msra.mxu0 0
        %1547 = vmatprep.subr.bf16.mxu0 0
        %1548 = vmatpush1.bf16.msra.mxu0 0
        %1549 = vmatprep.subr.bf16.mxu0 0
        %1550 = vmatpush1.bf16.msra.mxu0 0
        %1551 = vmatprep.subr.bf16.mxu0 0
        %1552 = vmatpush1.bf16.msra.mxu0 0
        %1553 = vmatprep.subr.bf16.mxu0 0
        %1554 = vmatpush1.bf16.msra.mxu0 0
        %1555 = vmatprep.subr.bf16.mxu0 0
        %1556 = vmatpush1.bf16.msra.mxu0 0
        %1557 = vmatprep.subr.bf16.mxu0 0
        %1558 = vmatpush1.bf16.msra.mxu0 0
        %1559 = vmatprep.subr.bf16.mxu0 0
        %1560 = vmatpush1.bf16.msra.mxu0 0
        %1561 = vmatprep.subr.bf16.mxu0 0
        %1562 = vmatpush1.bf16.msra.mxu0 0
        %1563 = vmatprep.subr.bf16.mxu0 0
        %1564 = vmatpush1.bf16.msra.mxu0 0
        %1565 = vmatprep.mubr.bf16.mxu0 0
        %1566 = vmatmul.mubr.bf16.gmra.mrb[0].mxu0 %v1213
        %v1567 = vpop.f32.mrb[0].mxu0
        %v1568 = vadd.f32 0.0, %v1567
        %v1569 = vpop.f32.mrb[0].mxu0
        %v1570 = vadd.f32 0.0, %v1569
        %v1571 = vpop.f32.mrb[0].mxu0
        %v1572 = vadd.f32 0.0, %v1571
        %v1573 = vpop.f32.mrb[0].mxu0
        %v1574 = vadd.f32 0.0, %v1573
        %1575 = vmatprep.mubr.bf16.mxu0 0
        %1576 = vmatmul.mubr.bf16.gmra.mrb[0].mxu0 %v1216
        %v1577 = vpop.f32.mrb[0].mxu0
        %v1578 = vadd.f32 0.0, %v1577
        %v1579 = vpop.f32.mrb[0].mxu0
        %v1580 = vadd.f32 0.0, %v1579
        %v1581 = vpop.f32.mrb[0].mxu0
        %v1582 = vadd.f32 0.0, %v1581
        %v1583 = vpop.f32.mrb[0].mxu0
        %v1584 = vadd.f32 0.0, %v1583
        %1585 = vmatprep.mubr.bf16.mxu0 0
        %1586 = vmatmul.mubr.bf16.gmra.mrb[0].mxu0 %v1219
        %v1587 = vpop.f32.mrb[0].mxu0
        %v1588 = vadd.f32 0.0, %v1587
        %v1589 = vpop.f32.mrb[0].mxu0
        %v1590 = vadd.f32 0.0, %v1589
        %v1591 = vpop.f32.mrb[0].mxu0
        %v1592 = vadd.f32 0.0, %v1591
        %v1593 = vpop.f32.mrb[0].mxu0
        %v1594 = vadd.f32 0.0, %v1593
        %1595 = vmatprep.mubr.bf16.mxu0 0
        %1596 = vmatmul.mubr.bf16.gmra.mrb[0].mxu0 %v1222
        %v1597 = vpop.f32.mrb[0].mxu0
        %v1598 = vadd.f32 0.0, %v1597
        %v1599 = vpop.f32.mrb[0].mxu0
        %v1600 = vadd.f32 0.0, %v1599
        %v1601 = vpop.f32.mrb[0].mxu0
        %v1602 = vadd.f32 0.0, %v1601
        %v1603 = vpop.f32.mrb[0].mxu0
        %v1604 = vadd.f32 0.0, %v1603
        %1605 = vmatprep.mubr.bf16.mxu0 0
        %1606 = vmatmul.mubr.bf16.gmra.mrb[0].mxu0 %v1225
        %v1607 = vpop.f32.mrb[0].mxu0
        %v1608 = vadd.f32 0.0, %v1607
        %v1609 = vpop.f32.mrb[0].mxu0
        %v1610 = vadd.f32 0.0, %v1609
        %v1611 = vpop.f32.mrb[0].mxu0
        %v1612 = vadd.f32 0.0, %v1611
        %v1613 = vpop.f32.mrb[0].mxu0
        %v1614 = vadd.f32 0.0, %v1613
        %1615 = vmatprep.mubr.bf16.mxu0 0
        %1616 = vmatmul.mubr.bf16.gmra.mrb[0].mxu0 %v1228
        %v1617 = vpop.f32.mrb[0].mxu0
        %v1618 = vadd.f32 0.0, %v1617
        %v1619 = vpop.f32.mrb[0].mxu0
        %v1620 = vadd.f32 0.0, %v1619
        %v1621 = vpop.f32.mrb[0].mxu0
        %v1622 = vadd.f32 0.0, %v1621
        %v1623 = vpop.f32.mrb[0].mxu0
        %v1624 = vadd.f32 0.0, %v1623
        %1625 = vdwg.mxu0
        %v1626 = vsub.f32 %v454, %v1289
        %v1627 = vsub.f32 %v457, %v1293
        %v1628 = vsub.f32 %v462, %v1299
        %v1629 = vsub.f32 %v465, %v1303
        %v1630 = vsub.f32 %v470, %v1309
        %v1631 = vsub.f32 %v473, %v1313
        %v1632 = vsub.f32 %v478, %v1319
        %v1633 = vsub.f32 %v481, %v1323
        %v1634 = vsub.f32 %v486, %v1329
        %v1635 = vsub.f32 %v489, %v1333
        %v1636 = vsub.f32 %v494, %v1339
        %v1637 = vsub.f32 %v497, %v1343
        %v1638 = vld [vmem:[%s350] sm:$0x7]
        %v1639 = vlaneseq
        %v1640 = vshrl.u32 %v1639, 7
        %v1641 = vsub.s32 0, %v1640
        %v1642 = vrot.slane %v1638, %v1641
        %v1643 = vmul.f32 %v1626, %v1642
        %v1644 = vmul.f32 %v1627, %v1642
        %v1645 = vmul.f32 %v1628, %v1642
        %v1646 = vmul.f32 %v1629, %v1642
        %v1647 = vlaneseq
        %v1648 = vshrl.u32 %v1647, 7
        %v1649 = vsub.s32 1, %v1648
        %v1650 = vrot.slane %v1638, %v1649
        %v1651 = vmul.f32 %v1630, %v1650
        %v1652 = vmul.f32 %v1631, %v1650
        %v1653 = vmul.f32 %v1632, %v1650
        %v1654 = vmul.f32 %v1633, %v1650
        %v1655 = vadd.f32 %v1643, %v1651
        %v1656 = vadd.f32 %v1644, %v1652
        %v1657 = vadd.f32 %v1645, %v1653
        %v1658 = vadd.f32 %v1646, %v1654
        %v1659 = vlaneseq
        %v1660 = vshrl.u32 %v1659, 7
        %v1661 = vsub.s32 2, %v1660
        %v1662 = vrot.slane %v1638, %v1661
        %v1663 = vmul.f32 %v1634, %v1662
        %v1664 = vmul.f32 %v1635, %v1662
        %v1665 = vmul.f32 %v1636, %v1662
        %v1666 = vmul.f32 %v1637, %v1662
        %v1667 = vadd.f32 %v1655, %v1663
        %v1668 = vadd.f32 %v1656, %v1664
        %v1669 = vadd.f32 %v1657, %v1665
        %v1670 = vadd.f32 %v1658, %v1666
        %v1671 = vsub.f32 %v454, %v1291
        %v1672 = vsub.f32 %v457, %v1295
        %v1673 = vsub.f32 %v462, %v1301
        %v1674 = vsub.f32 %v465, %v1305
        %v1675 = vsub.f32 %v470, %v1311
        %v1676 = vsub.f32 %v473, %v1315
        %v1677 = vsub.f32 %v478, %v1321
        %v1678 = vsub.f32 %v481, %v1325
        %v1679 = vsub.f32 %v486, %v1331
        %v1680 = vsub.f32 %v489, %v1335
        %v1681 = vsub.f32 %v494, %v1341
        %v1682 = vsub.f32 %v497, %v1345
        %s1683 = scalar_lea.vmem %s350, 4
        %v1684 = vld [vmem:[%s1683] sm:$0x7]
        %v1685 = vlaneseq
        %v1686 = vshrl.u32 %v1685, 7
        %v1687 = vsub.s32 0, %v1686
        %v1688 = vrot.slane %v1684, %v1687
        %v1689 = vmul.f32 %v1671, %v1688
        %v1690 = vmul.f32 %v1672, %v1688
        %v1691 = vmul.f32 %v1673, %v1688
        %v1692 = vmul.f32 %v1674, %v1688
        %v1693 = vlaneseq
        %v1694 = vshrl.u32 %v1693, 7
        %v1695 = vsub.s32 1, %v1694
        %v1696 = vrot.slane %v1684, %v1695
        %v1697 = vmul.f32 %v1675, %v1696
        %v1698 = vmul.f32 %v1676, %v1696
        %v1699 = vmul.f32 %v1677, %v1696
        %v1700 = vmul.f32 %v1678, %v1696
        %v1701 = vadd.f32 %v1689, %v1697
        %v1702 = vadd.f32 %v1690, %v1698
        %v1703 = vadd.f32 %v1691, %v1699
        %v1704 = vadd.f32 %v1692, %v1700
        %v1705 = vlaneseq
        %v1706 = vshrl.u32 %v1705, 7
        %v1707 = vsub.s32 2, %v1706
        %v1708 = vrot.slane %v1684, %v1707
        %v1709 = vmul.f32 %v1679, %v1708
        %v1710 = vmul.f32 %v1680, %v1708
        %v1711 = vmul.f32 %v1681, %v1708
        %v1712 = vmul.f32 %v1682, %v1708
        %v1713 = vadd.f32 %v1701, %v1709
        %v1714 = vadd.f32 %v1702, %v1710
        %v1715 = vadd.f32 %v1703, %v1711
        %v1716 = vadd.f32 %v1704, %v1712
        %v1717 = vmax.f32 %v1667, %v1713
        %v1718 = vmax.f32 %v1668, %v1714
        %v1719 = vmax.f32 %v1669, %v1715
        %v1720 = vmax.f32 %v1670, %v1716
        %v1721 = vsub.f32 %v454, %v1382
        %v1722 = vsub.f32 %v457, %v1386
        %v1723 = vsub.f32 %v462, %v1392
        %v1724 = vsub.f32 %v465, %v1396
        %v1725 = vsub.f32 %v470, %v1402
        %v1726 = vsub.f32 %v473, %v1406
        %v1727 = vsub.f32 %v478, %v1412
        %v1728 = vsub.f32 %v481, %v1416
        %v1729 = vsub.f32 %v486, %v1422
        %v1730 = vsub.f32 %v489, %v1426
        %v1731 = vsub.f32 %v494, %v1432
        %v1732 = vsub.f32 %v497, %v1436
        %s1733 = scalar_lea.vmem %s350, 8
        %v1734 = vld [vmem:[%s1733] sm:$0x7]
        %v1735 = vlaneseq
        %v1736 = vshrl.u32 %v1735, 7
        %v1737 = vsub.s32 0, %v1736
        %v1738 = vrot.slane %v1734, %v1737
        %v1739 = vmul.f32 %v1721, %v1738
        %v1740 = vmul.f32 %v1722, %v1738
        %v1741 = vmul.f32 %v1723, %v1738
        %v1742 = vmul.f32 %v1724, %v1738
        %v1743 = vlaneseq
        %v1744 = vshrl.u32 %v1743, 7
        %v1745 = vsub.s32 1, %v1744
        %v1746 = vrot.slane %v1734, %v1745
        %v1747 = vmul.f32 %v1725, %v1746
        %v1748 = vmul.f32 %v1726, %v1746
        %v1749 = vmul.f32 %v1727, %v1746
        %v1750 = vmul.f32 %v1728, %v1746
        %v1751 = vadd.f32 %v1739, %v1747
        %v1752 = vadd.f32 %v1740, %v1748
        %v1753 = vadd.f32 %v1741, %v1749
        %v1754 = vadd.f32 %v1742, %v1750
        %v1755 = vlaneseq
        %v1756 = vshrl.u32 %v1755, 7
        %v1757 = vsub.s32 2, %v1756
        %v1758 = vrot.slane %v1734, %v1757
        %v1759 = vmul.f32 %v1729, %v1758
        %v1760 = vmul.f32 %v1730, %v1758
        %v1761 = vmul.f32 %v1731, %v1758
        %v1762 = vmul.f32 %v1732, %v1758
        %v1763 = vadd.f32 %v1751, %v1759
        %v1764 = vadd.f32 %v1752, %v1760
        %v1765 = vadd.f32 %v1753, %v1761
        %v1766 = vadd.f32 %v1754, %v1762
        %v1767 = vmax.f32 %v1717, %v1763
        %v1768 = vmax.f32 %v1718, %v1764
        %v1769 = vmax.f32 %v1719, %v1765
        %v1770 = vmax.f32 %v1720, %v1766
        %v1771 = vsub.f32 %v454, %v1384
        %v1772 = vsub.f32 %v457, %v1388
        %v1773 = vsub.f32 %v462, %v1394
        %v1774 = vsub.f32 %v465, %v1398
        %v1775 = vsub.f32 %v470, %v1404
        %v1776 = vsub.f32 %v473, %v1408
        %v1777 = vsub.f32 %v478, %v1414
        %v1778 = vsub.f32 %v481, %v1418
        %v1779 = vsub.f32 %v486, %v1424
        %v1780 = vsub.f32 %v489, %v1428
        %v1781 = vsub.f32 %v494, %v1434
        %v1782 = vsub.f32 %v497, %v1438
        %s1783 = scalar_lea.vmem %s350, 12
        %v1784 = vld [vmem:[%s1783] sm:$0x7]
        %v1785 = vlaneseq
        %v1786 = vshrl.u32 %v1785, 7
        %v1787 = vsub.s32 0, %v1786
        %v1788 = vrot.slane %v1784, %v1787
        %v1789 = vmul.f32 %v1771, %v1788
        %v1790 = vmul.f32 %v1772, %v1788
        %v1791 = vmul.f32 %v1773, %v1788
        %v1792 = vmul.f32 %v1774, %v1788
        %v1793 = vlaneseq
        %v1794 = vshrl.u32 %v1793, 7
        %v1795 = vsub.s32 1, %v1794
        %v1796 = vrot.slane %v1784, %v1795
        %v1797 = vmul.f32 %v1775, %v1796
        %v1798 = vmul.f32 %v1776, %v1796
        %v1799 = vmul.f32 %v1777, %v1796
        %v1800 = vmul.f32 %v1778, %v1796
        %v1801 = vadd.f32 %v1789, %v1797
        %v1802 = vadd.f32 %v1790, %v1798
        %v1803 = vadd.f32 %v1791, %v1799
        %v1804 = vadd.f32 %v1792, %v1800
        %v1805 = vlaneseq
        %v1806 = vshrl.u32 %v1805, 7
        %v1807 = vsub.s32 2, %v1806
        %v1808 = vrot.slane %v1784, %v1807
        %v1809 = vmul.f32 %v1779, %v1808
        %v1810 = vmul.f32 %v1780, %v1808
        %v1811 = vmul.f32 %v1781, %v1808
        %v1812 = vmul.f32 %v1782, %v1808
        %v1813 = vadd.f32 %v1801, %v1809
        %v1814 = vadd.f32 %v1802, %v1810
        %v1815 = vadd.f32 %v1803, %v1811
        %v1816 = vadd.f32 %v1804, %v1812
        %v1817 = vmax.f32 %v1767, %v1813
        %v1818 = vmax.f32 %v1768, %v1814
        %v1819 = vmax.f32 %v1769, %v1815
        %v1820 = vmax.f32 %v1770, %v1816
        %v1821 = vsub.f32 %v454, %v1475
        %v1822 = vsub.f32 %v457, %v1479
        %v1823 = vsub.f32 %v462, %v1485
        %v1824 = vsub.f32 %v465, %v1489
        %v1825 = vsub.f32 %v470, %v1495
        %v1826 = vsub.f32 %v473, %v1499
        %v1827 = vsub.f32 %v478, %v1505
        %v1828 = vsub.f32 %v481, %v1509
        %v1829 = vsub.f32 %v486, %v1515
        %v1830 = vsub.f32 %v489, %v1519
        %v1831 = vsub.f32 %v494, %v1525
        %v1832 = vsub.f32 %v497, %v1529
        %s1833 = scalar_lea.vmem %s350, 16
        %v1834 = vld [vmem:[%s1833] sm:$0x7]
        %v1835 = vlaneseq
        %v1836 = vshrl.u32 %v1835, 7
        %v1837 = vsub.s32 0, %v1836
        %v1838 = vrot.slane %v1834, %v1837
        %v1839 = vmul.f32 %v1821, %v1838
        %v1840 = vmul.f32 %v1822, %v1838
        %v1841 = vmul.f32 %v1823, %v1838
        %v1842 = vmul.f32 %v1824, %v1838
        %v1843 = vlaneseq
        %v1844 = vshrl.u32 %v1843, 7
        %v1845 = vsub.s32 1, %v1844
        %v1846 = vrot.slane %v1834, %v1845
        %v1847 = vmul.f32 %v1825, %v1846
        %v1848 = vmul.f32 %v1826, %v1846
        %v1849 = vmul.f32 %v1827, %v1846
        %v1850 = vmul.f32 %v1828, %v1846
        %v1851 = vadd.f32 %v1839, %v1847
        %v1852 = vadd.f32 %v1840, %v1848
        %v1853 = vadd.f32 %v1841, %v1849
        %v1854 = vadd.f32 %v1842, %v1850
        %v1855 = vlaneseq
        %v1856 = vshrl.u32 %v1855, 7
        %v1857 = vsub.s32 2, %v1856
        %v1858 = vrot.slane %v1834, %v1857
        %v1859 = vmul.f32 %v1829, %v1858
        %v1860 = vmul.f32 %v1830, %v1858
        %v1861 = vmul.f32 %v1831, %v1858
        %v1862 = vmul.f32 %v1832, %v1858
        %v1863 = vadd.f32 %v1851, %v1859
        %v1864 = vadd.f32 %v1852, %v1860
        %v1865 = vadd.f32 %v1853, %v1861
        %v1866 = vadd.f32 %v1854, %v1862
        %v1867 = vmax.f32 %v1817, %v1863
        %v1868 = vmax.f32 %v1818, %v1864
        %v1869 = vmax.f32 %v1819, %v1865
        %v1870 = vmax.f32 %v1820, %v1866
        %v1871 = vsub.f32 %v454, %v1477
        %v1872 = vsub.f32 %v457, %v1481
        %v1873 = vsub.f32 %v462, %v1487
        %v1874 = vsub.f32 %v465, %v1491
        %v1875 = vsub.f32 %v470, %v1497
        %v1876 = vsub.f32 %v473, %v1501
        %v1877 = vsub.f32 %v478, %v1507
        %v1878 = vsub.f32 %v481, %v1511
        %v1879 = vsub.f32 %v486, %v1517
        %v1880 = vsub.f32 %v489, %v1521
        %v1881 = vsub.f32 %v494, %v1527
        %v1882 = vsub.f32 %v497, %v1531
        %s1883 = scalar_lea.vmem %s350, 20
        %v1884 = vld [vmem:[%s1883] sm:$0x7]
        %v1885 = vlaneseq
        %v1886 = vshrl.u32 %v1885, 7
        %v1887 = vsub.s32 0, %v1886
        %v1888 = vrot.slane %v1884, %v1887
        %v1889 = vmul.f32 %v1871, %v1888
        %v1890 = vmul.f32 %v1872, %v1888
        %v1891 = vmul.f32 %v1873, %v1888
        %v1892 = vmul.f32 %v1874, %v1888
        %v1893 = vlaneseq
        %v1894 = vshrl.u32 %v1893, 7
        %v1895 = vsub.s32 1, %v1894
        %v1896 = vrot.slane %v1884, %v1895
        %v1897 = vmul.f32 %v1875, %v1896
        %v1898 = vmul.f32 %v1876, %v1896
        %v1899 = vmul.f32 %v1877, %v1896
        %v1900 = vmul.f32 %v1878, %v1896
        %v1901 = vadd.f32 %v1889, %v1897
        %v1902 = vadd.f32 %v1890, %v1898
        %v1903 = vadd.f32 %v1891, %v1899
        %v1904 = vadd.f32 %v1892, %v1900
        %v1905 = vlaneseq
        %v1906 = vshrl.u32 %v1905, 7
        %v1907 = vsub.s32 2, %v1906
        %v1908 = vrot.slane %v1884, %v1907
        %v1909 = vmul.f32 %v1879, %v1908
        %v1910 = vmul.f32 %v1880, %v1908
        %v1911 = vmul.f32 %v1881, %v1908
        %v1912 = vmul.f32 %v1882, %v1908
        %v1913 = vadd.f32 %v1901, %v1909
        %v1914 = vadd.f32 %v1902, %v1910
        %v1915 = vadd.f32 %v1903, %v1911
        %v1916 = vadd.f32 %v1904, %v1912
        %v1917 = vmax.f32 %v1867, %v1913
        %v1918 = vmax.f32 %v1868, %v1914
        %v1919 = vmax.f32 %v1869, %v1915
        %v1920 = vmax.f32 %v1870, %v1916
        %v1921 = vsub.f32 %v454, %v1568
        %v1922 = vsub.f32 %v457, %v1572
        %v1923 = vsub.f32 %v462, %v1578
        %v1924 = vsub.f32 %v465, %v1582
        %v1925 = vsub.f32 %v470, %v1588
        %v1926 = vsub.f32 %v473, %v1592
        %v1927 = vsub.f32 %v478, %v1598
        %v1928 = vsub.f32 %v481, %v1602
        %v1929 = vsub.f32 %v486, %v1608
        %v1930 = vsub.f32 %v489, %v1612
        %v1931 = vsub.f32 %v494, %v1618
        %v1932 = vsub.f32 %v497, %v1622
        %s1933 = scalar_lea.vmem %s350, 24
        %v1934 = vld [vmem:[%s1933] sm:$0x7]
        %v1935 = vlaneseq
        %v1936 = vshrl.u32 %v1935, 7
        %v1937 = vsub.s32 0, %v1936
        %v1938 = vrot.slane %v1934, %v1937
        %v1939 = vmul.f32 %v1921, %v1938
        %v1940 = vmul.f32 %v1922, %v1938
        %v1941 = vmul.f32 %v1923, %v1938
        %v1942 = vmul.f32 %v1924, %v1938
        %v1943 = vlaneseq
        %v1944 = vshrl.u32 %v1943, 7
        %v1945 = vsub.s32 1, %v1944
        %v1946 = vrot.slane %v1934, %v1945
        %v1947 = vmul.f32 %v1925, %v1946
        %v1948 = vmul.f32 %v1926, %v1946
        %v1949 = vmul.f32 %v1927, %v1946
        %v1950 = vmul.f32 %v1928, %v1946
        %v1951 = vadd.f32 %v1939, %v1947
        %v1952 = vadd.f32 %v1940, %v1948
        %v1953 = vadd.f32 %v1941, %v1949
        %v1954 = vadd.f32 %v1942, %v1950
        %v1955 = vlaneseq
        %v1956 = vshrl.u32 %v1955, 7
        %v1957 = vsub.s32 2, %v1956
        %v1958 = vrot.slane %v1934, %v1957
        %v1959 = vmul.f32 %v1929, %v1958
        %v1960 = vmul.f32 %v1930, %v1958
        %v1961 = vmul.f32 %v1931, %v1958
        %v1962 = vmul.f32 %v1932, %v1958
        %v1963 = vadd.f32 %v1951, %v1959
        %v1964 = vadd.f32 %v1952, %v1960
        %v1965 = vadd.f32 %v1953, %v1961
        %v1966 = vadd.f32 %v1954, %v1962
        %v1967 = vmax.f32 %v1917, %v1963
        %v1968 = vmax.f32 %v1918, %v1964
        %v1969 = vmax.f32 %v1919, %v1965
        %v1970 = vmax.f32 %v1920, %v1966
        %v1971 = vsub.f32 %v454, %v1570
        %v1972 = vsub.f32 %v457, %v1574
        %v1973 = vsub.f32 %v462, %v1580
        %v1974 = vsub.f32 %v465, %v1584
        %v1975 = vsub.f32 %v470, %v1590
        %v1976 = vsub.f32 %v473, %v1594
        %v1977 = vsub.f32 %v478, %v1600
        %v1978 = vsub.f32 %v481, %v1604
        %v1979 = vsub.f32 %v486, %v1610
        %v1980 = vsub.f32 %v489, %v1614
        %v1981 = vsub.f32 %v494, %v1620
        %v1982 = vsub.f32 %v497, %v1624
        %s1983 = scalar_lea.vmem %s350, 28
        %v1984 = vld [vmem:[%s1983] sm:$0x7]
        %v1985 = vlaneseq
        %v1986 = vshrl.u32 %v1985, 7
        %v1987 = vsub.s32 0, %v1986
        %v1988 = vrot.slane %v1984, %v1987
        %v1989 = vmul.f32 %v1971, %v1988
        %v1990 = vmul.f32 %v1972, %v1988
        %v1991 = vmul.f32 %v1973, %v1988
        %v1992 = vmul.f32 %v1974, %v1988
        %v1993 = vlaneseq
        %v1994 = vshrl.u32 %v1993, 7
        %v1995 = vsub.s32 1, %v1994
        %v1996 = vrot.slane %v1984, %v1995
        %v1997 = vmul.f32 %v1975, %v1996
        %v1998 = vmul.f32 %v1976, %v1996
        %v1999 = vmul.f32 %v1977, %v1996
        %v2000 = vmul.f32 %v1978, %v1996
        %v2001 = vadd.f32 %v1989, %v1997
        %v2002 = vadd.f32 %v1990, %v1998
        %v2003 = vadd.f32 %v1991, %v1999
        %v2004 = vadd.f32 %v1992, %v2000
        %v2005 = vlaneseq
        %v2006 = vshrl.u32 %v2005, 7
        %v2007 = vsub.s32 2, %v2006
        %v2008 = vrot.slane %v1984, %v2007
        %v2009 = vmul.f32 %v1979, %v2008
        %v2010 = vmul.f32 %v1980, %v2008
        %v2011 = vmul.f32 %v1981, %v2008
        %v2012 = vmul.f32 %v1982, %v2008
        %v2013 = vadd.f32 %v2001, %v2009
        %v2014 = vadd.f32 %v2002, %v2010
        %v2015 = vadd.f32 %v2003, %v2011
        %v2016 = vadd.f32 %v2004, %v2012
        %v2017 = vmax.f32 %v1967, %v2013
        %v2018 = vmax.f32 %v1968, %v2014
        %v2019 = vmax.f32 %v1969, %v2015
        %v2020 = vmax.f32 %v1970, %v2016
        %2021 = vst [vmem:[%s323] sm:$0xff] %v2017
        %2022 = vst [vmem:[%s323 + $0x8] sm:$0xff] %v2018
        %2023 = vst [vmem:[%s323 + $0x10] sm:$0xff] %v2019
        %2024 = vst [vmem:[%s323 + $0x18] sm:$0xff] %v2020
        %s2025 = sand.u32 %s194, 1
        %s2026 = scalar_lea.sflag [#allocation3], %s2025
        %s2027 = sand.u32 %s194, 1
        %s2028 = smul.addr %s2027, 32
        %s2029 = scalar_lea.vmem [#allocation2], %s2028
        // Predicated region
        $region45: #{tpu_custom_call.1} parent=43 // pred_check
          %p2030 = pneg %p204
        $region46: #{tpu_custom_call.1} parent=43 // pred_check_branch
          %2032 = sbr.rel (%p2030) target = $region48
        $region47: #{tpu_custom_call.1} parent=43 // pred_region
          %s2034 = ssub.s32 512, 512
          %2035 = vsyncadd %s2026, %s2034
          %s2036 = smul.addr %s24, 4
          %s2037 = sadd.s32 %s25, %s2036
          %s2038 = smul.addr %s2037, 128
          %s2039 = scalar_lea.hbm %s6, %s2038
          %s2040 = sshll.u32 %s2029, 4
          %s2041 = int_to_ptr.vmem [resolvable:$true] %s2040
          %2046 = dma.vmem_to_hbm [thread:$0]  %s2041, 512, %s2039, %s2026, 128, 128, 8
        $region48: #{tpu_custom_call.1} parent=43 // pred_fallthru
          _
      $region44: #{tpu_custom_call.1} parent=5 // pred_fallthru
        _
      %p2047 = scmp.le.s32.totalorder 2, %s15
      // Predicated region
      $region49: #{tpu_custom_call.1} parent=5 // pred_check
        %p2048 = pneg %p2047
      $region50: #{tpu_custom_call.1} parent=5 // pred_check_branch
        %2050 = sbr.rel (%p2048) target = $region52
      $region51: #{tpu_custom_call.1} parent=5 // pred_region
        %s2051 = ssub.s32 %s15, 2
        // Predicated region
        $region53: #{tpu_custom_call.1} parent=51 // pred_check
          %p2052 = pneg %p210
        $region54: #{tpu_custom_call.1} parent=51 // pred_check_branch
          %2054 = sbr.rel (%p2052) target = $region56
        $region55: #{tpu_custom_call.1} parent=51 // pred_region
          %s2055 = sand.u32 %s195, 1
          %s2056 = scalar_lea.sflag [#allocation3], %s2055
          %s2057 = sand.u32 %s195, 1
          %s2058 = smul.addr %s2057, 32
          %s2059 = scalar_lea.vmem [#allocation2], %s2058
          %2060 = dma.done %s2056, 512
        $region56: #{tpu_custom_call.1} parent=51 // pred_fallthru
          _
      $region52: #{tpu_custom_call.1} parent=5 // pred_fallthru
        _
    $region6: #{tpu_custom_call.1} parent=1 // loop_footer
      %s19 = sadd.s32 1, %s15
    $region7: #{tpu_custom_call.1} parent=1 // loop_footer_branch
      %14 = sbr.rel target = $region3
    $region8: #{tpu_custom_call.1} parent=1 // loop_exit
      _
    %2061 = vsyncpa [#allocation3], 1
    %s2062 = scalar_lea.sflag [#allocation3], 1
    %2063 = vsyncpa %s2062, 1

</llo_original>
